<compile_context>
chip_gen: v5e
topology: v5e:2x2
jax: 0.10.0
libtpu: 0.0.40
codegen_flags: <defaults>
</compile_context>

<pallas_src>
import functools
import math

import jax
import jax.numpy as jnp
from jax.experimental import pallas as pl
from jax.experimental.pallas import tpu as pltpu


@functools.lru_cache(maxsize=None)
def _vmem_limit_bytes():
    # Generation-aware scoped-VMEM cap: ~0.8x physical leaves Mosaic headroom
    # for internal scratch / double buffers (v7x: ~51 of 64 MiB; v5e/v6e:
    # ~102 of 128 MiB).  Conservative fallback if the query is unavailable.
    try:
        phys = pltpu.get_tpu_info().vmem_capacity_bytes
        if phys and phys > 0:
            return int(phys * 0.8)
    except Exception:
        pass
    return 48 * 1024 * 1024


# ----------------------------- in-kernel helpers -----------------------------

def _layernorm(x, g, b, eps=1e-6):
    # Matches codertimo BERT-pytorch LayerNorm: unbiased variance (n-1) and
    # eps added to std (NOT torch.nn.LayerNorm).  Reciprocal goes to the EUP.
    n = x.shape[-1]
    mean = jnp.mean(x, axis=-1, keepdims=True)
    var = jnp.sum((x - mean) ** 2, axis=-1, keepdims=True) * (1.0 / (n - 1))
    inv = pl.reciprocal(jnp.sqrt(var) + eps, approx=True)
    return (x - mean) * inv * g + b


def _gelu(x):
    # tanh-approximation GELU used in BERT-pytorch
    c = 0.7978845608028654  # sqrt(2/pi)
    return 0.5 * x * (1.0 + jnp.tanh(c * (x + 0.044715 * x * x * x)))


# ---------------------- kernel 1: LN1 + fused QKV proj -----------------------

def ln_qkv_kernel(x_ref, g_ref, b_ref, wqkv_ref, bqkv_ref,
                  q_ref, kt_ref, v_ref):
    x = x_ref[0].astype(jnp.float32)                       # (TS, H)
    H = x.shape[-1]

    h = _layernorm(x, g_ref[0], b_ref[0]).astype(jnp.bfloat16)
    qkv = (jnp.dot(h, wqkv_ref[...], preferred_element_type=jnp.float32)
           + bqkv_ref[0])                                  # (TS, 3H) f32

    # Lane-dense stores: Q and V are the 128-aligned [0:H] / [2H:3H] slices
    # stored as (TS, H) slabs; K is transposed ONCE here (per key tile) to
    # (H, TS) so the attention kernel only runs NN matmuls.  The 1/sqrt(dk)
    # scale is already folded into the Q columns of Wqkv / bqkv.
    q_ref[0] = qkv[:, :H].astype(q_ref.dtype)
    kt_ref[0] = jnp.transpose(qkv[:, H:2 * H]).astype(kt_ref.dtype)
    v_ref[0] = qkv[:, 2 * H:].astype(v_ref.dtype)


# ------------- kernel 2: attention + out-proj + LN2 + FFN (+res) -------------

def attn_ffn_kernel(x_ref, q_ref, kt_ref, v_ref, bias_ref,
                    woh_ref, bo_ref, ln2g_ref, ln2b_ref,
                    w1_ref, b1_ref, w2_ref, b2_ref, out_ref, *, n_heads):
    x = x_ref[0].astype(jnp.float32)          # (TQ, H) residual stream
    q = q_ref[0]                              # (TQ, H) bf16, Q pre-scaled
    kt = kt_ref[0]                            # (H,  S) bf16 (K transposed)
    v = v_ref[0]                              # (S,  H) bf16
    tq, H = q.shape
    S = v.shape[0]
    dk = H // n_heads

    # Rank-1 key-padding bias; broadcast hoisted out of the head loop.
    bias = jnp.broadcast_to(bias_ref[0].astype(jnp.float32), (tq, S))

    # Per-head attention: head split happens on loaded values (amortized, no
    # masked stores), only one head's (TQ, S) score tile is live at a time,
    # softmax normalization is deferred until after the PV matmul, and the
    # output projection is accumulated head-by-head into a single (TQ, H) f32
    # accumulator (no (nh, TQ, H) intermediate, no separate head-sum).
    # TODO(synk): for S >~ 1k add a key-dim "arbitrary" grid axis with online
    # softmax (m/l/acc scratch + pl.when init/finalize) to cap the score tile.
    acc = jnp.zeros((tq, H), jnp.float32)
    for hd in range(n_heads):
        lo = hd * dk
        s = jnp.dot(q[:, lo:lo + dk], kt[lo:lo + dk, :],
                    preferred_element_type=jnp.float32)     # (TQ, S)
        s = s + bias
        m = jnp.max(s, axis=-1, keepdims=True)
        e = jnp.exp(s - m)
        l = jnp.sum(e, axis=-1, keepdims=True)
        ctx = jnp.dot(e.astype(jnp.bfloat16), v[:, lo:lo + dk],
                      preferred_element_type=jnp.float32)   # (TQ, dk)
        ctx = ctx * pl.reciprocal(l, approx=True)           # deferred softmax
        acc = acc + jnp.dot(ctx.astype(jnp.bfloat16), woh_ref[hd],
                            preferred_element_type=jnp.float32)  # (TQ, H)
    x = x + acc + bo_ref[0]

    # ---- sublayer 2: x + FFN(LayerNorm(x)) -----------------------------------
    h2 = _layernorm(x, ln2g_ref[0], ln2b_ref[0]).astype(jnp.bfloat16)
    ff = _gelu(jnp.dot(h2, w1_ref[...], preferred_element_type=jnp.float32)
               + b1_ref[0])
    ff = (jnp.dot(ff.astype(jnp.bfloat16), w2_ref[...],
                  preferred_element_type=jnp.float32) + b2_ref[0])
    x = x + ff

    out_ref[0] = x.astype(out_ref.dtype)


# ----------------------------- layer wrapper ---------------------------------

def transformer_block(x, bias, params, n_heads, q_tile=128):
    """x: (B,S,H) bf16 residual; bias: (B,1,S) f32 additive key-padding bias."""
    (wqkv, bqkv, woh, bo, ln1g, ln1b, ln2g, ln2b, w1, b1, w2, b2) = params
    B, S, H = x.shape
    Hff = w1.shape[1]
    nh = n_heads
    dk = H // nh
    ts = S if S <= q_tile else q_tile
    assert S % ts == 0, "sequence length must be a multiple of the tile size"

    def const(shape):
        # Weight/bias blocks: index never changes -> DMA'd once by the
        # pipeline.  NOTE: pipeline_mode=pl.Buffered(1) would additionally
        # halve their VMEM residency (matters for BERT-large on v7x); left at
        # the default here for broad JAX-version compatibility.
        return pl.BlockSpec(shape, lambda i, j: (0,) * len(shape))

    cparams = pltpu.CompilerParams(
        dimension_semantics=("parallel", "parallel"),
        vmem_limit_bytes=_vmem_limit_bytes(),
    )

    # ---- kernel 1: LN1 + fused QKV projection (lane-dense slab outputs) ------
    q, kt, v = pl.pallas_call(
        ln_qkv_kernel,
        out_shape=[jax.ShapeDtypeStruct((B, S, H), jnp.bfloat16),    # Q slab
                   jax.ShapeDtypeStruct((B, H, S), jnp.bfloat16),    # K^T slab
                   jax.ShapeDtypeStruct((B, S, H), jnp.bfloat16)],   # V slab
        grid=(B, S // ts),
        in_specs=[
            pl.BlockSpec((1, ts, H), lambda i, j: (i, j, 0)),   # x tile
            const((1, H)), const((1, H)),                       # ln1 gamma, beta
            const((H, 3 * H)), const((1, 3 * H)),               # Wqkv, bqkv
        ],
        out_specs=[
            pl.BlockSpec((1, ts, H), lambda i, j: (i, j, 0)),   # Q
            pl.BlockSpec((1, H, ts), lambda i, j: (i, 0, j)),   # K^T
            pl.BlockSpec((1, ts, H), lambda i, j: (i, j, 0)),   # V
        ],
        compiler_params=cparams,
    )(x, ln1g, ln1b, wqkv, bqkv)

    # ---- kernel 2: attention + output proj + LN2 + FFN -----------------------
    return pl.pallas_call(
        functools.partial(attn_ffn_kernel, n_heads=nh),
        out_shape=jax.ShapeDtypeStruct((B, S, H), jnp.bfloat16),
        grid=(B, S // ts),
        in_specs=[
            pl.BlockSpec((1, ts, H), lambda i, j: (i, j, 0)),          # residual
            pl.BlockSpec((1, ts, H), lambda i, j: (i, j, 0)),          # Q tile
            pl.BlockSpec((1, H, S), lambda i, j: (i, 0, 0)),           # K^T full
            pl.BlockSpec((1, S, H), lambda i, j: (i, 0, 0)),           # V full
            pl.BlockSpec((1, 1, S), lambda i, j: (i, 0, 0)),           # key bias
            const((nh, dk, H)), const((1, H)),                         # Wo, bo
            const((1, H)), const((1, H)),                              # ln2 g, b
            const((H, Hff)), const((1, Hff)),                          # W1, b1
            const((Hff, H)), const((1, H)),                            # W2, b2
        ],
        out_specs=pl.BlockSpec((1, ts, H), lambda i, j: (i, j, 0)),
        compiler_params=cparams,
    )(x, q, kt, v, bias, woh, bo, ln2g, ln2b, w1, b1, w2, b2)


# ----------------------------- embedding (glue) -------------------------------

def sinusoidal_pos_encoding(max_seq_len, d_model):
    pos = jnp.arange(max_seq_len, dtype=jnp.float32)[:, None]
    div = jnp.exp(jnp.arange(0, d_model, 2, dtype=jnp.float32)
                  * -(math.log(10000.0) / d_model))
    pe = jnp.zeros((max_seq_len, d_model), jnp.float32)
    pe = pe.at[:, 0::2].set(jnp.sin(pos * div))
    pe = pe.at[:, 1::2].set(jnp.cos(pos * div))
    return pe


def bert_embedding(token_seq, token_table, pe):
    # TODO(synk): embedding gather kept in plain JAX (table lookup is glue,
    # not a matmul/reduction hot path).
    S = token_seq.shape[1]
    tok = jnp.take(token_table, token_seq, axis=0)          # (B,S,H) f32
    return (tok + pe[None, :S, :]).astype(jnp.bfloat16)


# ----------------------------- parameter init ---------------------------------

def init_params(key, vocab_size, max_seq_len, hidden, n_layers, n_heads):
    keys = jax.random.split(key, 1 + n_layers)
    tok = jax.random.normal(keys[0], (vocab_size, hidden), jnp.float32) * 0.02
    tok = tok.at[0].set(0.0)                                 # padding_idx=0
    pe = sinusoidal_pos_encoding(max_seq_len, hidden)
    dk = hidden // n_heads
    scale = 1.0 / math.sqrt(dk)

    def linear(k, n_in, n_out):
        w = jax.random.normal(k, (n_in, n_out), jnp.float32) * 0.02
        b = jnp.zeros((1, n_out), jnp.float32)
        return w, b

    layers = []
    for li in range(n_layers):
        lk = jax.random.split(keys[1 + li], 6)
        wq, bq = linear(lk[0], hidden, hidden)
        wk, bk = linear(lk[1], hidden, hidden)
        wv, bv = linear(lk[2], hidden, hidden)
        wo, _ = linear(lk[3], hidden, hidden)
        w1, b1 = linear(lk[4], hidden, 4 * hidden)
        w2, b2 = linear(lk[5], 4 * hidden, hidden)

        # Fused QKV weight (H, 3H) bf16 with 1/sqrt(dk) folded into the Q
        # columns (and bq) so no in-kernel scale multiply is needed.
        wqkv = jnp.concatenate([wq * scale, wk, wv], axis=1).astype(jnp.bfloat16)
        bqkv = jnp.concatenate([bq * scale, bk, bv], axis=1)       # (1,3H) f32
        # Head-major output projection: sum_h ctx_h @ woh[h] == concat @ Wo.
        woh = wo.reshape(n_heads, dk, hidden).astype(jnp.bfloat16)
        bo = jnp.zeros((1, hidden), jnp.float32)
        ln1g = jnp.ones((1, hidden), jnp.float32)
        ln1b = jnp.zeros((1, hidden), jnp.float32)
        ln2g = jnp.ones((1, hidden), jnp.float32)
        ln2b = jnp.zeros((1, hidden), jnp.float32)
        layers.append((wqkv, bqkv, woh, bo, ln1g, ln1b, ln2g, ln2b,
                       w1.astype(jnp.bfloat16), b1,
                       w2.astype(jnp.bfloat16), b2))
    return tok, pe, layers


# ----------------------------- full forward -----------------------------------

def bert_lss_forward(token_seq, pos_mask, tok_table, pe, layers,
                     *, n_heads, q_tile=128):
    # pos_mask: (B,1,S,S) key-padding broadcast (PyTorch squeeze(0) is a no-op
    # for B > 1).  BERT-LSS padding masks are key-only, so we pass a rank-1
    # additive bias (B,1,S) and broadcast it inside the kernel.
    # TODO(synk): a general (non key-broadcast) (S,S) attention mask would need
    # the full-rank (B,S,S) bias path.
    m = pos_mask
    if m.ndim == 4:
        m = m[:, 0]
    key_mask = m[:, 0, :]                                    # (B, S)
    # NOTE: for fully-masked query rows the additive -1e9 bias yields
    # softmax(raw scores) instead of the reference's uniform 1/S; such padded
    # rows are never consumed downstream.
    bias = jnp.where(key_mask == 0, -1e9, 0.0).astype(jnp.float32)[:, None, :]
    x = bert_embedding(token_seq, tok_table, pe)             # (B,S,H) bf16
    for params in layers:
        x = transformer_block(x, bias, params, n_heads, q_tile=q_tile)
    return x.astype(jnp.float32)


# ----------------------------- demo -------------------------------------------

if __name__ == "__main__":
    vocab_size, max_seq_len = 50, 8
    hidden, n_layers, attn_heads = 32, 2, 4
    B, S = 2, 8                      # B even -> both v7x TensorCores get work

    key = jax.random.PRNGKey(0)
    kp, kt = jax.random.split(key)
    tok_table, pe, layers = init_params(kp, vocab_size, max_seq_len, hidden,
                                        n_layers, attn_heads)

    token_seq = jax.random.randint(kt, (B, S), 1, vocab_size, dtype=jnp.int32)
    token_seq = token_seq.at[:, -2:].set(0)             # some padding
    pad = (token_seq > 0).astype(jnp.float32)           # (B,S)
    pos_mask = jnp.broadcast_to(pad[:, None, None, :], (B, 1, S, S))

    fwd = jax.jit(functools.partial(bert_lss_forward, n_heads=attn_heads))
    out = fwd(token_seq, pos_mask, tok_table, pe, layers)
    out = jax.block_until_ready(out)
    assert out.shape == (B, S, hidden)
    print("KERNEL_OK")
</pallas_src>

<mosaic_0001>
module attributes {stable_mosaic.version = 11 : i64} {
  func.func @ln_qkv_kernel(%arg0: i32, %arg1: i32, %arg2: memref<1x8x32xbf16, #tpu.memory_space<vmem>>, %arg3: memref<1x32xf32, #tpu.memory_space<vmem>>, %arg4: memref<1x32xf32, #tpu.memory_space<vmem>>, %arg5: memref<32x96xbf16, #tpu.memory_space<vmem>>, %arg6: memref<1x96xf32, #tpu.memory_space<vmem>>, %arg7: memref<1x8x32xbf16, #tpu.memory_space<vmem>>, %arg8: memref<1x32x8xbf16, #tpu.memory_space<vmem>>, %arg9: memref<1x8x32xbf16, #tpu.memory_space<vmem>>) attributes {dimension_semantics = [#tpu.dimension_semantics<parallel>, #tpu.dimension_semantics<parallel>], iteration_bounds = array<i64: 2, 1>, scalar_prefetch = 0 : i64, scratch_operands = 0 : i64, tpu.core_type = #tpu.core_type<tc>, window_params = [{transform_indices = @transform_0, window_bounds = array<i64: 1, 8, 32>}, {pipeline_mode = #tpu.pipeline_mode<synchronous>, transform_indices = @transform_1, window_bounds = array<i64: 1, 32>}, {pipeline_mode = #tpu.pipeline_mode<synchronous>, transform_indices = @transform_2, window_bounds = array<i64: 1, 32>}, {pipeline_mode = #tpu.pipeline_mode<synchronous>, transform_indices = @transform_3, window_bounds = array<i64: 32, 96>}, {pipeline_mode = #tpu.pipeline_mode<synchronous>, transform_indices = @transform_4, window_bounds = array<i64: 1, 96>}, {transform_indices = @transform_5, window_bounds = array<i64: 1, 8, 32>}, {transform_indices = @transform_6, window_bounds = array<i64: 1, 32, 8>}, {transform_indices = @transform_7, window_bounds = array<i64: 1, 8, 32>}]} {
    %c0 = arith.constant 0 : index
    %c0_0 = arith.constant 0 : index
    %c0_1 = arith.constant 0 : index
    %0 = vector.load %arg2[%c0, %c0_0, %c0_1] : memref<1x8x32xbf16, #tpu.memory_space<vmem>>, vector<1x8x32xbf16>
    %1 = vector.shape_cast %0 : vector<1x8x32xbf16> to vector<8x32xbf16>
    %2 = arith.extf %1 : vector<8x32xbf16> to vector<8x32xf32>
    %c0_2 = arith.constant 0 : index
    %c0_3 = arith.constant 0 : index
    %3 = vector.load %arg3[%c0_2, %c0_3] : memref<1x32xf32, #tpu.memory_space<vmem>>, vector<1x32xf32>
    %4 = vector.shape_cast %3 : vector<1x32xf32> to vector<32xf32>
    %c0_4 = arith.constant 0 : index
    %c0_5 = arith.constant 0 : index
    %5 = vector.load %arg4[%c0_4, %c0_5] : memref<1x32xf32, #tpu.memory_space<vmem>>, vector<1x32xf32>
    %6 = vector.shape_cast %5 : vector<1x32xf32> to vector<32xf32>
    %cst = arith.constant dense<0.000000e+00> : vector<8xf32>
    %7 = vector.multi_reduction <add>, %2, %cst [1] : vector<8x32xf32> to vector<8xf32>
    %8 = vector.shape_cast %7 : vector<8xf32> to vector<8x1xf32>
    %cst_6 = arith.constant 3.200000e+01 : f32
    %9 = vector.broadcast %cst_6 : f32 to vector<8x1xf32>
    %10 = arith.divf %8, %9 : vector<8x1xf32>
    %11 = vector.broadcast %10 : vector<8x1xf32> to vector<8x32xf32>
    %12 = arith.subf %2, %11 : vector<8x32xf32>
    %13 = arith.mulf %12, %12 : vector<8x32xf32>
    %cst_7 = arith.constant dense<0.000000e+00> : vector<8xf32>
    %14 = vector.multi_reduction <add>, %13, %cst_7 [1] : vector<8x32xf32> to vector<8xf32>
    %15 = vector.shape_cast %14 : vector<8xf32> to vector<8x1xf32>
    %cst_8 = arith.constant 0.0322580636 : f32
    %16 = vector.broadcast %cst_8 : f32 to vector<8x1xf32>
    %17 = arith.mulf %15, %16 : vector<8x1xf32>
    %18 = math.sqrt %17 : vector<8x1xf32>
    %cst_9 = arith.constant 9.99999997E-7 : f32
    %19 = vector.broadcast %cst_9 : f32 to vector<8x1xf32>
    %20 = arith.addf %18, %19 : vector<8x1xf32>
    %21 = tpu.reciprocal %20 {approx = true} : vector<8x1xf32> -> vector<8x1xf32>
    %22 = vector.broadcast %10 : vector<8x1xf32> to vector<8x32xf32>
    %23 = arith.subf %2, %22 : vector<8x32xf32>
    %24 = vector.broadcast %21 : vector<8x1xf32> to vector<8x32xf32>
    %25 = arith.mulf %23, %24 : vector<8x32xf32>
    %26 = vector.shape_cast %4 : vector<32xf32> to vector<1x32xf32>
    %27 = vector.broadcast %26 : vector<1x32xf32> to vector<8x32xf32>
    %28 = arith.mulf %25, %27 : vector<8x32xf32>
    %29 = vector.shape_cast %6 : vector<32xf32> to vector<1x32xf32>
    %30 = vector.broadcast %29 : vector<1x32xf32> to vector<8x32xf32>
    %31 = arith.addf %28, %30 : vector<8x32xf32>
    %32 = arith.truncf %31 : vector<8x32xf32> to vector<8x32xbf16>
    %c0_10 = arith.constant 0 : index
    %c0_11 = arith.constant 0 : index
    %33 = vector.load %arg5[%c0_10, %c0_11] : memref<32x96xbf16, #tpu.memory_space<vmem>>, vector<32x96xbf16>
    %cst_12 = arith.constant dense<0.000000e+00> : vector<8x96xf32>
    %34 = tpu.matmul %32, %33, %cst_12 {dimension_numbers = #tpu.dot_dimension_numbers<[1], [0], [0], [1], [0, 0, 1, 1], [], []>} : vector<8x32xbf16>, vector<32x96xbf16>, vector<8x96xf32> -> vector<8x96xf32>
    %c0_13 = arith.constant 0 : index
    %c0_14 = arith.constant 0 : index
    %35 = vector.load %arg6[%c0_13, %c0_14] : memref<1x96xf32, #tpu.memory_space<vmem>>, vector<1x96xf32>
    %36 = vector.shape_cast %35 : vector<1x96xf32> to vector<96xf32>
    %37 = vector.shape_cast %36 : vector<96xf32> to vector<1x96xf32>
    %38 = vector.broadcast %37 : vector<1x96xf32> to vector<8x96xf32>
    %39 = arith.addf %34, %38 : vector<8x96xf32>
    %40 = vector.extract_strided_slice %39 {offsets = [0, 0], sizes = [8, 32], strides = [1, 1]} : vector<8x96xf32> to vector<8x32xf32>
    %41 = arith.truncf %40 : vector<8x32xf32> to vector<8x32xbf16>
    %c0_15 = arith.constant 0 : index
    %c0_16 = arith.constant 0 : index
    %c0_17 = arith.constant 0 : index
    %42 = vector.load %arg7[%c0_15, %c0_16, %c0_17] : memref<1x8x32xbf16, #tpu.memory_space<vmem>>, vector<1x8x32xbf16>
    %43 = vector.shape_cast %42 : vector<1x8x32xbf16> to vector<8x32xbf16>
    %44 = vector.shape_cast %41 : vector<8x32xbf16> to vector<1x8x32xbf16>
    tpu.vector_store %arg7[%c0_15, %c0_16, %c0_17], %44 {strides = array<i32>} : memref<1x8x32xbf16, #tpu.memory_space<vmem>>, vector<1x8x32xbf16>,
    %45 = vector.extract_strided_slice %39 {offsets = [0, 32], sizes = [8, 32], strides = [1, 1]} : vector<8x96xf32> to vector<8x32xf32>
    %46 = tpu.transpose %45, [1, 0] : vector<8x32xf32> -> vector<32x8xf32>
    %47 = arith.truncf %46 : vector<32x8xf32> to vector<32x8xbf16>
    %c0_18 = arith.constant 0 : index
    %c0_19 = arith.constant 0 : index
    %c0_20 = arith.constant 0 : index
    %48 = vector.load %arg8[%c0_18, %c0_19, %c0_20] : memref<1x32x8xbf16, #tpu.memory_space<vmem>>, vector<1x32x8xbf16>
    %49 = vector.shape_cast %48 : vector<1x32x8xbf16> to vector<32x8xbf16>
    %50 = vector.shape_cast %47 : vector<32x8xbf16> to vector<1x32x8xbf16>
    tpu.vector_store %arg8[%c0_18, %c0_19, %c0_20], %50 {strides = array<i32>} : memref<1x32x8xbf16, #tpu.memory_space<vmem>>, vector<1x32x8xbf16>,
    %51 = vector.extract_strided_slice %39 {offsets = [0, 64], sizes = [8, 32], strides = [1, 1]} : vector<8x96xf32> to vector<8x32xf32>
    %52 = arith.truncf %51 : vector<8x32xf32> to vector<8x32xbf16>
    %c0_21 = arith.constant 0 : index
    %c0_22 = arith.constant 0 : index
    %c0_23 = arith.constant 0 : index
    %53 = vector.load %arg9[%c0_21, %c0_22, %c0_23] : memref<1x8x32xbf16, #tpu.memory_space<vmem>>, vector<1x8x32xbf16>
    %54 = vector.shape_cast %53 : vector<1x8x32xbf16> to vector<8x32xbf16>
    %55 = vector.shape_cast %52 : vector<8x32xbf16> to vector<1x8x32xbf16>
    tpu.vector_store %arg9[%c0_21, %c0_22, %c0_23], %55 {strides = array<i32>} : memref<1x8x32xbf16, #tpu.memory_space<vmem>>, vector<1x8x32xbf16>,
    return
  }
  func.func @transform_0(%arg0: i32, %arg1: i32) -> (i32, i32, i32) {
    %c0_i32 = arith.constant 0 : i32
    %c0_i32_0 = arith.constant 0 : i32
    return %arg0, %arg1, %c0_i32 : i32, i32, i32
  }
  func.func @transform_1(%arg0: i32, %arg1: i32) -> (i32, i32) {
    %c0_i32 = arith.constant 0 : i32
    %c0_i32_0 = arith.constant 0 : i32
    %c0_i32_1 = arith.constant 0 : i32
    return %c0_i32, %c0_i32_0 : i32, i32
  }
  func.func @transform_2(%arg0: i32, %arg1: i32) -> (i32, i32) {
    %c0_i32 = arith.constant 0 : i32
    %c0_i32_0 = arith.constant 0 : i32
    %c0_i32_1 = arith.constant 0 : i32
    return %c0_i32, %c0_i32_0 : i32, i32
  }
  func.func @transform_3(%arg0: i32, %arg1: i32) -> (i32, i32) {
    %c0_i32 = arith.constant 0 : i32
    %c0_i32_0 = arith.constant 0 : i32
    %c0_i32_1 = arith.constant 0 : i32
    return %c0_i32, %c0_i32_0 : i32, i32
  }
  func.func @transform_4(%arg0: i32, %arg1: i32) -> (i32, i32) {
    %c0_i32 = arith.constant 0 : i32
    %c0_i32_0 = arith.constant 0 : i32
    %c0_i32_1 = arith.constant 0 : i32
    return %c0_i32, %c0_i32_0 : i32, i32
  }
  func.func @transform_5(%arg0: i32, %arg1: i32) -> (i32, i32, i32) {
    %c0_i32 = arith.constant 0 : i32
    %c0_i32_0 = arith.constant 0 : i32
    return %arg0, %arg1, %c0_i32 : i32, i32, i32
  }
  func.func @transform_6(%arg0: i32, %arg1: i32) -> (i32, i32, i32) {
    %c0_i32 = arith.constant 0 : i32
    %c0_i32_0 = arith.constant 0 : i32
    return %arg0, %c0_i32, %arg1 : i32, i32, i32
  }
  func.func @transform_7(%arg0: i32, %arg1: i32) -> (i32, i32, i32) {
    %c0_i32 = arith.constant 0 : i32
    %c0_i32_0 = arith.constant 0 : i32
    return %arg0, %arg1, %c0_i32 : i32, i32, i32
  }
}

module attributes {stable_mosaic.version = 11 : i64} {
  func.func @attn_ffn_kernel(%arg0: i32, %arg1: i32, %arg2: memref<1x8x32xbf16, #tpu.memory_space<vmem>>, %arg3: memref<1x8x32xbf16, #tpu.memory_space<vmem>>, %arg4: memref<1x32x8xbf16, #tpu.memory_space<vmem>>, %arg5: memref<1x8x32xbf16, #tpu.memory_space<vmem>>, %arg6: memref<1x1x8xf32, #tpu.memory_space<vmem>>, %arg7: memref<4x8x32xbf16, #tpu.memory_space<vmem>>, %arg8: memref<1x32xf32, #tpu.memory_space<vmem>>, %arg9: memref<1x32xf32, #tpu.memory_space<vmem>>, %arg10: memref<1x32xf32, #tpu.memory_space<vmem>>, %arg11: memref<32x128xbf16, #tpu.memory_space<vmem>>, %arg12: memref<1x128xf32, #tpu.memory_space<vmem>>, %arg13: memref<128x32xbf16, #tpu.memory_space<vmem>>, %arg14: memref<1x32xf32, #tpu.memory_space<vmem>>, %arg15: memref<1x8x32xbf16, #tpu.memory_space<vmem>>) attributes {dimension_semantics = [#tpu.dimension_semantics<parallel>, #tpu.dimension_semantics<parallel>], iteration_bounds = array<i64: 2, 1>, scalar_prefetch = 0 : i64, scratch_operands = 0 : i64, tpu.core_type = #tpu.core_type<tc>, window_params = [{transform_indices = @transform_0, window_bounds = array<i64: 1, 8, 32>}, {transform_indices = @transform_1, window_bounds = array<i64: 1, 8, 32>}, {transform_indices = @transform_2, window_bounds = array<i64: 1, 32, 8>}, {transform_indices = @transform_3, window_bounds = array<i64: 1, 8, 32>}, {transform_indices = @transform_4, window_bounds = array<i64: 1, 1, 8>}, {pipeline_mode = #tpu.pipeline_mode<synchronous>, transform_indices = @transform_5, window_bounds = array<i64: 4, 8, 32>}, {pipeline_mode = #tpu.pipeline_mode<synchronous>, transform_indices = @transform_6, window_bounds = array<i64: 1, 32>}, {pipeline_mode = #tpu.pipeline_mode<synchronous>, transform_indices = @transform_7, window_bounds = array<i64: 1, 32>}, {pipeline_mode = #tpu.pipeline_mode<synchronous>, transform_indices = @transform_8, window_bounds = array<i64: 1, 32>}, {pipeline_mode = #tpu.pipeline_mode<synchronous>, transform_indices = @transform_9, window_bounds = array<i64: 32, 128>}, {pipeline_mode = #tpu.pipeline_mode<synchronous>, transform_indices = @transform_10, window_bounds = array<i64: 1, 128>}, {pipeline_mode = #tpu.pipeline_mode<synchronous>, transform_indices = @transform_11, window_bounds = array<i64: 128, 32>}, {pipeline_mode = #tpu.pipeline_mode<synchronous>, transform_indices = @transform_12, window_bounds = array<i64: 1, 32>}, {transform_indices = @transform_13, window_bounds = array<i64: 1, 8, 32>}]} {
    %c0 = arith.constant 0 : index
    %c0_0 = arith.constant 0 : index
    %c0_1 = arith.constant 0 : index
    %0 = vector.load %arg2[%c0, %c0_0, %c0_1] : memref<1x8x32xbf16, #tpu.memory_space<vmem>>, vector<1x8x32xbf16>
    %1 = vector.shape_cast %0 : vector<1x8x32xbf16> to vector<8x32xbf16>
    %2 = arith.extf %1 : vector<8x32xbf16> to vector<8x32xf32>
    %c0_2 = arith.constant 0 : index
    %c0_3 = arith.constant 0 : index
    %c0_4 = arith.constant 0 : index
    %3 = vector.load %arg3[%c0_2, %c0_3, %c0_4] : memref<1x8x32xbf16, #tpu.memory_space<vmem>>, vector<1x8x32xbf16>
    %4 = vector.shape_cast %3 : vector<1x8x32xbf16> to vector<8x32xbf16>
    %c0_5 = arith.constant 0 : index
    %c0_6 = arith.constant 0 : index
    %c0_7 = arith.constant 0 : index
    %5 = vector.load %arg4[%c0_5, %c0_6, %c0_7] : memref<1x32x8xbf16, #tpu.memory_space<vmem>>, vector<1x32x8xbf16>
    %6 = vector.shape_cast %5 : vector<1x32x8xbf16> to vector<32x8xbf16>
    %c0_8 = arith.constant 0 : index
    %c0_9 = arith.constant 0 : index
    %c0_10 = arith.constant 0 : index
    %7 = vector.load %arg5[%c0_8, %c0_9, %c0_10] : memref<1x8x32xbf16, #tpu.memory_space<vmem>>, vector<1x8x32xbf16>
    %8 = vector.shape_cast %7 : vector<1x8x32xbf16> to vector<8x32xbf16>
    %c0_11 = arith.constant 0 : index
    %c0_12 = arith.constant 0 : index
    %c0_13 = arith.constant 0 : index
    %9 = vector.load %arg6[%c0_11, %c0_12, %c0_13] : memref<1x1x8xf32, #tpu.memory_space<vmem>>, vector<1x1x8xf32>
    %10 = vector.shape_cast %9 : vector<1x1x8xf32> to vector<1x8xf32>
    %11 = vector.shape_cast %10 : vector<1x8xf32> to vector<1x8xf32>
    %12 = vector.broadcast %11 : vector<1x8xf32> to vector<8x8xf32>
    %cst = arith.constant 0.000000e+00 : f32
    %13 = vector.broadcast %cst : f32 to vector<8x32xf32>
    %14 = vector.extract_strided_slice %4 {offsets = [0, 0], sizes = [8, 8], strides = [1, 1]} : vector<8x32xbf16> to vector<8x8xbf16>
    %15 = vector.extract_strided_slice %6 {offsets = [0, 0], sizes = [8, 8], strides = [1, 1]} : vector<32x8xbf16> to vector<8x8xbf16>
    %cst_14 = arith.constant dense<0.000000e+00> : vector<8x8xf32>
    %16 = tpu.matmul %14, %15, %cst_14 {dimension_numbers = #tpu.dot_dimension_numbers<[1], [0], [0], [1], [0, 0, 1, 1], [], []>} : vector<8x8xbf16>, vector<8x8xbf16>, vector<8x8xf32> -> vector<8x8xf32>
    %17 = arith.addf %16, %12 : vector<8x8xf32>
    %cst_15 = arith.constant dense<0xFF800000> : vector<8xf32>
    %18 = vector.multi_reduction <maximumf>, %17, %cst_15 [1] : vector<8x8xf32> to vector<8xf32>
    %19 = vector.shape_cast %18 : vector<8xf32> to vector<8x1xf32>
    %20 = vector.broadcast %19 : vector<8x1xf32> to vector<8x8xf32>
    %21 = arith.subf %17, %20 : vector<8x8xf32>
    %22 = math.exp %21 : vector<8x8xf32>
    %cst_16 = arith.constant dense<0.000000e+00> : vector<8xf32>
    %23 = vector.multi_reduction <add>, %22, %cst_16 [1] : vector<8x8xf32> to vector<8xf32>
    %24 = vector.shape_cast %23 : vector<8xf32> to vector<8x1xf32>
    %25 = arith.truncf %22 : vector<8x8xf32> to vector<8x8xbf16>
    %26 = vector.extract_strided_slice %8 {offsets = [0, 0], sizes = [8, 8], strides = [1, 1]} : vector<8x32xbf16> to vector<8x8xbf16>
    %cst_17 = arith.constant dense<0.000000e+00> : vector<8x8xf32>
    %27 = tpu.matmul %25, %26, %cst_17 {dimension_numbers = #tpu.dot_dimension_numbers<[1], [0], [0], [1], [0, 0, 1, 1], [], []>} : vector<8x8xbf16>, vector<8x8xbf16>, vector<8x8xf32> -> vector<8x8xf32>
    %28 = tpu.reciprocal %24 {approx = true} : vector<8x1xf32> -> vector<8x1xf32>
    %29 = vector.broadcast %28 : vector<8x1xf32> to vector<8x8xf32>
    %30 = arith.mulf %27, %29 : vector<8x8xf32>
    %31 = arith.truncf %30 : vector<8x8xf32> to vector<8x8xbf16>
    %c0_18 = arith.constant 0 : index
    %c0_19 = arith.constant 0 : index
    %c0_20 = arith.constant 0 : index
    %32 = vector.load %arg7[%c0_18, %c0_19, %c0_20] : memref<4x8x32xbf16, #tpu.memory_space<vmem>>, vector<1x8x32xbf16>
    %33 = vector.shape_cast %32 : vector<1x8x32xbf16> to vector<8x32xbf16>
    %cst_21 = arith.constant dense<0.000000e+00> : vector<8x32xf32>
    %34 = tpu.matmul %31, %33, %cst_21 {dimension_numbers = #tpu.dot_dimension_numbers<[1], [0], [0], [1], [0, 0, 1, 1], [], []>} : vector<8x8xbf16>, vector<8x32xbf16>, vector<8x32xf32> -> vector<8x32xf32>
    %35 = arith.addf %13, %34 : vector<8x32xf32>
    %36 = vector.extract_strided_slice %4 {offsets = [0, 8], sizes = [8, 8], strides = [1, 1]} : vector<8x32xbf16> to vector<8x8xbf16>
    %37 = vector.extract_strided_slice %6 {offsets = [8, 0], sizes = [8, 8], strides = [1, 1]} : vector<32x8xbf16> to vector<8x8xbf16>
    %cst_22 = arith.constant dense<0.000000e+00> : vector<8x8xf32>
    %38 = tpu.matmul %36, %37, %cst_22 {dimension_numbers = #tpu.dot_dimension_numbers<[1], [0], [0], [1], [0, 0, 1, 1], [], []>} : vector<8x8xbf16>, vector<8x8xbf16>, vector<8x8xf32> -> vector<8x8xf32>
    %39 = arith.addf %38, %12 : vector<8x8xf32>
    %cst_23 = arith.constant dense<0xFF800000> : vector<8xf32>
    %40 = vector.multi_reduction <maximumf>, %39, %cst_23 [1] : vector<8x8xf32> to vector<8xf32>
    %41 = vector.shape_cast %40 : vector<8xf32> to vector<8x1xf32>
    %42 = vector.broadcast %41 : vector<8x1xf32> to vector<8x8xf32>
    %43 = arith.subf %39, %42 : vector<8x8xf32>
    %44 = math.exp %43 : vector<8x8xf32>
    %cst_24 = arith.constant dense<0.000000e+00> : vector<8xf32>
    %45 = vector.multi_reduction <add>, %44, %cst_24 [1] : vector<8x8xf32> to vector<8xf32>
    %46 = vector.shape_cast %45 : vector<8xf32> to vector<8x1xf32>
    %47 = arith.truncf %44 : vector<8x8xf32> to vector<8x8xbf16>
    %48 = vector.extract_strided_slice %8 {offsets = [0, 8], sizes = [8, 8], strides = [1, 1]} : vector<8x32xbf16> to vector<8x8xbf16>
    %cst_25 = arith.constant dense<0.000000e+00> : vector<8x8xf32>
    %49 = tpu.matmul %47, %48, %cst_25 {dimension_numbers = #tpu.dot_dimension_numbers<[1], [0], [0], [1], [0, 0, 1, 1], [], []>} : vector<8x8xbf16>, vector<8x8xbf16>, vector<8x8xf32> -> vector<8x8xf32>
    %50 = tpu.reciprocal %46 {approx = true} : vector<8x1xf32> -> vector<8x1xf32>
    %51 = vector.broadcast %50 : vector<8x1xf32> to vector<8x8xf32>
    %52 = arith.mulf %49, %51 : vector<8x8xf32>
    %53 = arith.truncf %52 : vector<8x8xf32> to vector<8x8xbf16>
    %c1 = arith.constant 1 : index
    %c0_26 = arith.constant 0 : index
    %c0_27 = arith.constant 0 : index
    %54 = vector.load %arg7[%c1, %c0_26, %c0_27] : memref<4x8x32xbf16, #tpu.memory_space<vmem>>, vector<1x8x32xbf16>
    %55 = vector.shape_cast %54 : vector<1x8x32xbf16> to vector<8x32xbf16>
    %cst_28 = arith.constant dense<0.000000e+00> : vector<8x32xf32>
    %56 = tpu.matmul %53, %55, %cst_28 {dimension_numbers = #tpu.dot_dimension_numbers<[1], [0], [0], [1], [0, 0, 1, 1], [], []>} : vector<8x8xbf16>, vector<8x32xbf16>, vector<8x32xf32> -> vector<8x32xf32>
    %57 = arith.addf %35, %56 : vector<8x32xf32>
    %58 = vector.extract_strided_slice %4 {offsets = [0, 16], sizes = [8, 8], strides = [1, 1]} : vector<8x32xbf16> to vector<8x8xbf16>
    %59 = vector.extract_strided_slice %6 {offsets = [16, 0], sizes = [8, 8], strides = [1, 1]} : vector<32x8xbf16> to vector<8x8xbf16>
    %cst_29 = arith.constant dense<0.000000e+00> : vector<8x8xf32>
    %60 = tpu.matmul %58, %59, %cst_29 {dimension_numbers = #tpu.dot_dimension_numbers<[1], [0], [0], [1], [0, 0, 1, 1], [], []>} : vector<8x8xbf16>, vector<8x8xbf16>, vector<8x8xf32> -> vector<8x8xf32>
    %61 = arith.addf %60, %12 : vector<8x8xf32>
    %cst_30 = arith.constant dense<0xFF800000> : vector<8xf32>
    %62 = vector.multi_reduction <maximumf>, %61, %cst_30 [1] : vector<8x8xf32> to vector<8xf32>
    %63 = vector.shape_cast %62 : vector<8xf32> to vector<8x1xf32>
    %64 = vector.broadcast %63 : vector<8x1xf32> to vector<8x8xf32>
    %65 = arith.subf %61, %64 : vector<8x8xf32>
    %66 = math.exp %65 : vector<8x8xf32>
    %cst_31 = arith.constant dense<0.000000e+00> : vector<8xf32>
    %67 = vector.multi_reduction <add>, %66, %cst_31 [1] : vector<8x8xf32> to vector<8xf32>
    %68 = vector.shape_cast %67 : vector<8xf32> to vector<8x1xf32>
    %69 = arith.truncf %66 : vector<8x8xf32> to vector<8x8xbf16>
    %70 = vector.extract_strided_slice %8 {offsets = [0, 16], sizes = [8, 8], strides = [1, 1]} : vector<8x32xbf16> to vector<8x8xbf16>
    %cst_32 = arith.constant dense<0.000000e+00> : vector<8x8xf32>
    %71 = tpu.matmul %69, %70, %cst_32 {dimension_numbers = #tpu.dot_dimension_numbers<[1], [0], [0], [1], [0, 0, 1, 1], [], []>} : vector<8x8xbf16>, vector<8x8xbf16>, vector<8x8xf32> -> vector<8x8xf32>
    %72 = tpu.reciprocal %68 {approx = true} : vector<8x1xf32> -> vector<8x1xf32>
    %73 = vector.broadcast %72 : vector<8x1xf32> to vector<8x8xf32>
    %74 = arith.mulf %71, %73 : vector<8x8xf32>
    %75 = arith.truncf %74 : vector<8x8xf32> to vector<8x8xbf16>
    %c2 = arith.constant 2 : index
    %c0_33 = arith.constant 0 : index
    %c0_34 = arith.constant 0 : index
    %76 = vector.load %arg7[%c2, %c0_33, %c0_34] : memref<4x8x32xbf16, #tpu.memory_space<vmem>>, vector<1x8x32xbf16>
    %77 = vector.shape_cast %76 : vector<1x8x32xbf16> to vector<8x32xbf16>
    %cst_35 = arith.constant dense<0.000000e+00> : vector<8x32xf32>
    %78 = tpu.matmul %75, %77, %cst_35 {dimension_numbers = #tpu.dot_dimension_numbers<[1], [0], [0], [1], [0, 0, 1, 1], [], []>} : vector<8x8xbf16>, vector<8x32xbf16>, vector<8x32xf32> -> vector<8x32xf32>
    %79 = arith.addf %57, %78 : vector<8x32xf32>
    %80 = vector.extract_strided_slice %4 {offsets = [0, 24], sizes = [8, 8], strides = [1, 1]} : vector<8x32xbf16> to vector<8x8xbf16>
    %81 = vector.extract_strided_slice %6 {offsets = [24, 0], sizes = [8, 8], strides = [1, 1]} : vector<32x8xbf16> to vector<8x8xbf16>
    %cst_36 = arith.constant dense<0.000000e+00> : vector<8x8xf32>
    %82 = tpu.matmul %80, %81, %cst_36 {dimension_numbers = #tpu.dot_dimension_numbers<[1], [0], [0], [1], [0, 0, 1, 1], [], []>} : vector<8x8xbf16>, vector<8x8xbf16>, vector<8x8xf32> -> vector<8x8xf32>
    %83 = arith.addf %82, %12 : vector<8x8xf32>
    %cst_37 = arith.constant dense<0xFF800000> : vector<8xf32>
    %84 = vector.multi_reduction <maximumf>, %83, %cst_37 [1] : vector<8x8xf32> to vector<8xf32>
    %85 = vector.shape_cast %84 : vector<8xf32> to vector<8x1xf32>
    %86 = vector.broadcast %85 : vector<8x1xf32> to vector<8x8xf32>
    %87 = arith.subf %83, %86 : vector<8x8xf32>
    %88 = math.exp %87 : vector<8x8xf32>
    %cst_38 = arith.constant dense<0.000000e+00> : vector<8xf32>
    %89 = vector.multi_reduction <add>, %88, %cst_38 [1] : vector<8x8xf32> to vector<8xf32>
    %90 = vector.shape_cast %89 : vector<8xf32> to vector<8x1xf32>
    %91 = arith.truncf %88 : vector<8x8xf32> to vector<8x8xbf16>
    %92 = vector.extract_strided_slice %8 {offsets = [0, 24], sizes = [8, 8], strides = [1, 1]} : vector<8x32xbf16> to vector<8x8xbf16>
    %cst_39 = arith.constant dense<0.000000e+00> : vector<8x8xf32>
    %93 = tpu.matmul %91, %92, %cst_39 {dimension_numbers = #tpu.dot_dimension_numbers<[1], [0], [0], [1], [0, 0, 1, 1], [], []>} : vector<8x8xbf16>, vector<8x8xbf16>, vector<8x8xf32> -> vector<8x8xf32>
    %94 = tpu.reciprocal %90 {approx = true} : vector<8x1xf32> -> vector<8x1xf32>
    %95 = vector.broadcast %94 : vector<8x1xf32> to vector<8x8xf32>
    %96 = arith.mulf %93, %95 : vector<8x8xf32>
    %97 = arith.truncf %96 : vector<8x8xf32> to vector<8x8xbf16>
    %c3 = arith.constant 3 : index
    %c0_40 = arith.constant 0 : index
    %c0_41 = arith.constant 0 : index
    %98 = vector.load %arg7[%c3, %c0_40, %c0_41] : memref<4x8x32xbf16, #tpu.memory_space<vmem>>, vector<1x8x32xbf16>
    %99 = vector.shape_cast %98 : vector<1x8x32xbf16> to vector<8x32xbf16>
    %cst_42 = arith.constant dense<0.000000e+00> : vector<8x32xf32>
    %100 = tpu.matmul %97, %99, %cst_42 {dimension_numbers = #tpu.dot_dimension_numbers<[1], [0], [0], [1], [0, 0, 1, 1], [], []>} : vector<8x8xbf16>, vector<8x32xbf16>, vector<8x32xf32> -> vector<8x32xf32>
    %101 = arith.addf %79, %100 : vector<8x32xf32>
    %102 = arith.addf %2, %101 : vector<8x32xf32>
    %c0_43 = arith.constant 0 : index
    %c0_44 = arith.constant 0 : index
    %103 = vector.load %arg8[%c0_43, %c0_44] : memref<1x32xf32, #tpu.memory_space<vmem>>, vector<1x32xf32>
    %104 = vector.shape_cast %103 : vector<1x32xf32> to vector<32xf32>
    %105 = vector.shape_cast %104 : vector<32xf32> to vector<1x32xf32>
    %106 = vector.broadcast %105 : vector<1x32xf32> to vector<8x32xf32>
    %107 = arith.addf %102, %106 : vector<8x32xf32>
    %c0_45 = arith.constant 0 : index
    %c0_46 = arith.constant 0 : index
    %108 = vector.load %arg9[%c0_45, %c0_46] : memref<1x32xf32, #tpu.memory_space<vmem>>, vector<1x32xf32>
    %109 = vector.shape_cast %108 : vector<1x32xf32> to vector<32xf32>
    %c0_47 = arith.constant 0 : index
    %c0_48 = arith.constant 0 : index
    %110 = vector.load %arg10[%c0_47, %c0_48] : memref<1x32xf32, #tpu.memory_space<vmem>>, vector<1x32xf32>
    %111 = vector.shape_cast %110 : vector<1x32xf32> to vector<32xf32>
    %cst_49 = arith.constant dense<0.000000e+00> : vector<8xf32>
    %112 = vector.multi_reduction <add>, %107, %cst_49 [1] : vector<8x32xf32> to vector<8xf32>
    %113 = vector.shape_cast %112 : vector<8xf32> to vector<8x1xf32>
    %cst_50 = arith.constant 3.200000e+01 : f32
    %114 = vector.broadcast %cst_50 : f32 to vector<8x1xf32>
    %115 = arith.divf %113, %114 : vector<8x1xf32>
    %116 = vector.broadcast %115 : vector<8x1xf32> to vector<8x32xf32>
    %117 = arith.subf %107, %116 : vector<8x32xf32>
    %118 = arith.mulf %117, %117 : vector<8x32xf32>
    %cst_51 = arith.constant dense<0.000000e+00> : vector<8xf32>
    %119 = vector.multi_reduction <add>, %118, %cst_51 [1] : vector<8x32xf32> to vector<8xf32>
    %120 = vector.shape_cast %119 : vector<8xf32> to vector<8x1xf32>
    %cst_52 = arith.constant 0.0322580636 : f32
    %121 = vector.broadcast %cst_52 : f32 to vector<8x1xf32>
    %122 = arith.mulf %120, %121 : vector<8x1xf32>
    %123 = math.sqrt %122 : vector<8x1xf32>
    %cst_53 = arith.constant 9.99999997E-7 : f32
    %124 = vector.broadcast %cst_53 : f32 to vector<8x1xf32>
    %125 = arith.addf %123, %124 : vector<8x1xf32>
    %126 = tpu.reciprocal %125 {approx = true} : vector<8x1xf32> -> vector<8x1xf32>
    %127 = vector.broadcast %115 : vector<8x1xf32> to vector<8x32xf32>
    %128 = arith.subf %107, %127 : vector<8x32xf32>
    %129 = vector.broadcast %126 : vector<8x1xf32> to vector<8x32xf32>
    %130 = arith.mulf %128, %129 : vector<8x32xf32>
    %131 = vector.shape_cast %109 : vector<32xf32> to vector<1x32xf32>
    %132 = vector.broadcast %131 : vector<1x32xf32> to vector<8x32xf32>
    %133 = arith.mulf %130, %132 : vector<8x32xf32>
    %134 = vector.shape_cast %111 : vector<32xf32> to vector<1x32xf32>
    %135 = vector.broadcast %134 : vector<1x32xf32> to vector<8x32xf32>
    %136 = arith.addf %133, %135 : vector<8x32xf32>
    %137 = arith.truncf %136 : vector<8x32xf32> to vector<8x32xbf16>
    %c0_54 = arith.constant 0 : index
    %c0_55 = arith.constant 0 : index
    %138 = vector.load %arg11[%c0_54, %c0_55] : memref<32x128xbf16, #tpu.memory_space<vmem>>, vector<32x128xbf16>
    %cst_56 = arith.constant dense<0.000000e+00> : vector<8x128xf32>
    %139 = tpu.matmul %137, %138, %cst_56 {dimension_numbers = #tpu.dot_dimension_numbers<[1], [0], [0], [1], [0, 0, 1, 1], [], []>} : vector<8x32xbf16>, vector<32x128xbf16>, vector<8x128xf32> -> vector<8x128xf32>
    %c0_57 = arith.constant 0 : index
    %c0_58 = arith.constant 0 : index
    %140 = vector.load %arg12[%c0_57, %c0_58] : memref<1x128xf32, #tpu.memory_space<vmem>>, vector<1x128xf32>
    %141 = vector.shape_cast %140 : vector<1x128xf32> to vector<128xf32>
    %142 = vector.shape_cast %141 : vector<128xf32> to vector<1x128xf32>
    %143 = vector.broadcast %142 : vector<1x128xf32> to vector<8x128xf32>
    %144 = arith.addf %139, %143 : vector<8x128xf32>
    %cst_59 = arith.constant 5.000000e-01 : f32
    %145 = vector.broadcast %cst_59 : f32 to vector<8x128xf32>
    %146 = arith.mulf %145, %144 : vector<8x128xf32>
    %cst_60 = arith.constant 4.471500e-02 : f32
    %147 = vector.broadcast %cst_60 : f32 to vector<8x128xf32>
    %148 = arith.mulf %147, %144 : vector<8x128xf32>
    %149 = arith.mulf %148, %144 : vector<8x128xf32>
    %150 = arith.mulf %149, %144 : vector<8x128xf32>
    %151 = arith.addf %144, %150 : vector<8x128xf32>
    %cst_61 = arith.constant 0.797884583 : f32
    %152 = vector.broadcast %cst_61 : f32 to vector<8x128xf32>
    %153 = arith.mulf %152, %151 : vector<8x128xf32>
    %154 = math.tanh %153 : vector<8x128xf32>
    %cst_62 = arith.constant 1.000000e+00 : f32
    %155 = vector.broadcast %cst_62 : f32 to vector<8x128xf32>
    %156 = arith.addf %155, %154 : vector<8x128xf32>
    %157 = arith.mulf %146, %156 : vector<8x128xf32>
    %158 = arith.truncf %157 : vector<8x128xf32> to vector<8x128xbf16>
    %c0_63 = arith.constant 0 : index
    %c0_64 = arith.constant 0 : index
    %159 = vector.load %arg13[%c0_63, %c0_64] : memref<128x32xbf16, #tpu.memory_space<vmem>>, vector<128x32xbf16>
    %cst_65 = arith.constant dense<0.000000e+00> : vector<8x32xf32>
    %160 = tpu.matmul %158, %159, %cst_65 {dimension_numbers = #tpu.dot_dimension_numbers<[1], [0], [0], [1], [0, 0, 1, 1], [], []>} : vector<8x128xbf16>, vector<128x32xbf16>, vector<8x32xf32> -> vector<8x32xf32>
    %c0_66 = arith.constant 0 : index
    %c0_67 = arith.constant 0 : index
    %161 = vector.load %arg14[%c0_66, %c0_67] : memref<1x32xf32, #tpu.memory_space<vmem>>, vector<1x32xf32>
    %162 = vector.shape_cast %161 : vector<1x32xf32> to vector<32xf32>
    %163 = vector.shape_cast %162 : vector<32xf32> to vector<1x32xf32>
    %164 = vector.broadcast %163 : vector<1x32xf32> to vector<8x32xf32>
    %165 = arith.addf %160, %164 : vector<8x32xf32>
    %166 = arith.addf %107, %165 : vector<8x32xf32>
    %167 = arith.truncf %166 : vector<8x32xf32> to vector<8x32xbf16>
    %c0_68 = arith.constant 0 : index
    %c0_69 = arith.constant 0 : index
    %c0_70 = arith.constant 0 : index
    %168 = vector.load %arg15[%c0_68, %c0_69, %c0_70] : memref<1x8x32xbf16, #tpu.memory_space<vmem>>, vector<1x8x32xbf16>
    %169 = vector.shape_cast %168 : vector<1x8x32xbf16> to vector<8x32xbf16>
    %170 = vector.shape_cast %167 : vector<8x32xbf16> to vector<1x8x32xbf16>
    tpu.vector_store %arg15[%c0_68, %c0_69, %c0_70], %170 {strides = array<i32>} : memref<1x8x32xbf16, #tpu.memory_space<vmem>>, vector<1x8x32xbf16>,
    return
  }
  func.func @transform_0(%arg0: i32, %arg1: i32) -> (i32, i32, i32) {
    %c0_i32 = arith.constant 0 : i32
    %c0_i32_0 = arith.constant 0 : i32
    return %arg0, %arg1, %c0_i32 : i32, i32, i32
  }
  func.func @transform_1(%arg0: i32, %arg1: i32) -> (i32, i32, i32) {
    %c0_i32 = arith.constant 0 : i32
    %c0_i32_0 = arith.constant 0 : i32
    return %arg0, %arg1, %c0_i32 : i32, i32, i32
  }
  func.func @transform_2(%arg0: i32, %arg1: i32) -> (i32, i32, i32) {
    %c0_i32 = arith.constant 0 : i32
    %c0_i32_0 = arith.constant 0 : i32
    %c0_i32_1 = arith.constant 0 : i32
    return %arg0, %c0_i32, %c0_i32_0 : i32, i32, i32
  }
  func.func @transform_3(%arg0: i32, %arg1: i32) -> (i32, i32, i32) {
    %c0_i32 = arith.constant 0 : i32
    %c0_i32_0 = arith.constant 0 : i32
    %c0_i32_1 = arith.constant 0 : i32
    return %arg0, %c0_i32, %c0_i32_0 : i32, i32, i32
  }
  func.func @transform_4(%arg0: i32, %arg1: i32) -> (i32, i32, i32) {
    %c0_i32 = arith.constant 0 : i32
    %c0_i32_0 = arith.constant 0 : i32
    %c0_i32_1 = arith.constant 0 : i32
    return %arg0, %c0_i32, %c0_i32_0 : i32, i32, i32
  }
  func.func @transform_5(%arg0: i32, %arg1: i32) -> (i32, i32, i32) {
    %c0_i32 = arith.constant 0 : i32
    %c0_i32_0 = arith.constant 0 : i32
    %c0_i32_1 = arith.constant 0 : i32
    %c0_i32_2 = arith.constant 0 : i32
    return %c0_i32, %c0_i32_0, %c0_i32_1 : i32, i32, i32
  }
  func.func @transform_6(%arg0: i32, %arg1: i32) -> (i32, i32) {
    %c0_i32 = arith.constant 0 : i32
    %c0_i32_0 = arith.constant 0 : i32
    %c0_i32_1 = arith.constant 0 : i32
    return %c0_i32, %c0_i32_0 : i32, i32
  }
  func.func @transform_7(%arg0: i32, %arg1: i32) -> (i32, i32) {
    %c0_i32 = arith.constant 0 : i32
    %c0_i32_0 = arith.constant 0 : i32
    %c0_i32_1 = arith.constant 0 : i32
    return %c0_i32, %c0_i32_0 : i32, i32
  }
  func.func @transform_8(%arg0: i32, %arg1: i32) -> (i32, i32) {
    %c0_i32 = arith.constant 0 : i32
    %c0_i32_0 = arith.constant 0 : i32
    %c0_i32_1 = arith.constant 0 : i32
    return %c0_i32, %c0_i32_0 : i32, i32
  }
  func.func @transform_9(%arg0: i32, %arg1: i32) -> (i32, i32) {
    %c0_i32 = arith.constant 0 : i32
    %c0_i32_0 = arith.constant 0 : i32
    %c0_i32_1 = arith.constant 0 : i32
    return %c0_i32, %c0_i32_0 : i32, i32
  }
  func.func @transform_10(%arg0: i32, %arg1: i32) -> (i32, i32) {
    %c0_i32 = arith.constant 0 : i32
    %c0_i32_0 = arith.constant 0 : i32
    %c0_i32_1 = arith.constant 0 : i32
    return %c0_i32, %c0_i32_0 : i32, i32
  }
  func.func @transform_11(%arg0: i32, %arg1: i32) -> (i32, i32) {
    %c0_i32 = arith.constant 0 : i32
    %c0_i32_0 = arith.constant 0 : i32
    %c0_i32_1 = arith.constant 0 : i32
    return %c0_i32, %c0_i32_0 : i32, i32
  }
  func.func @transform_12(%arg0: i32, %arg1: i32) -> (i32, i32) {
    %c0_i32 = arith.constant 0 : i32
    %c0_i32_0 = arith.constant 0 : i32
    %c0_i32_1 = arith.constant 0 : i32
    return %c0_i32, %c0_i32_0 : i32, i32
  }
  func.func @transform_13(%arg0: i32, %arg1: i32) -> (i32, i32, i32) {
    %c0_i32 = arith.constant 0 : i32
    %c0_i32_0 = arith.constant 0 : i32
    return %arg0, %arg1, %c0_i32 : i32, i32, i32
  }
}

</mosaic_0001>

<llo_original>
// kernel: bert_lss_forward.4
$region0: #{bert_lss_forward.4}
  #allocation0 [shape = 'u32[]', space=smem, size = 0x4, offset = 0x4, fixed_abs, tag = 'smem constant byte address 0x4 - core index']
  #allocation1 [shape = 'u32[72,128]{1,0:T(1,128)}', space=vmem, size = 0x9000, scoped, tag = 'internal scratch']
  %s0 = inlined_call_operand.vmem [shape: bf16[2,8,32], index: 0, kind: input, shape index: {}]
  %s1 = inlined_call_operand.vmem [shape: f32[1,32], index: 1, kind: input, shape index: {}]
  %s2 = inlined_call_operand.vmem [shape: f32[1,32], index: 2, kind: input, shape index: {}]
  %s3 = inlined_call_operand.vmem [shape: bf16[32,96], index: 3, kind: input, shape index: {}]
  %s4 = inlined_call_operand.vmem [shape: f32[1,96], index: 4, kind: input, shape index: {}]
  %s5 = inlined_call_operand.vmem [shape: bf16[2,8,32], index: 5, kind: output, shape index: {0}]
  %s6 = inlined_call_operand.vmem [shape: bf16[2,32,8], index: 6, kind: output, shape index: {1}]
  %s7 = inlined_call_operand.vmem [shape: bf16[2,8,32], index: 7, kind: output, shape index: {2}]
  %8 = xla_tuple %s5, %s6, %s7
  %s9 = sld [smem:[#allocation0]]
  $region69: #{bert_lss_forward.4} parent=0
    _
  %s11 = ssub.s32 1, %s9
  %s12 = scalar_select 0, %s11, %s9
  loop: start=0, step=1, limit=4
  $region2: #{bert_lss_forward.4} parent=0 // loop_pre_header
    _
  $region3: #{bert_lss_forward.4} parent=0 // loop_header
    %s14 = sphi 0, %s18
    %p15 = scmp.ge.s32.totalorder %s14, 4
    %s21 = sphi 0, %s33
    %s22 = sphi 0, %s29
    %s23 = sphi 0, %s21
    %s24 = sphi 0, %s22
    %s25 = sphi 0, %s23
    %s26 = sphi 0, %s24
    %s38 = sphi 0, %s40
    %s41 = sphi 0, %s38
    %s42 = sphi 0, %s41
    %s58 = sphi 0, %s42
    %s62 = sphi 0, %s62
    %s64 = sphi 0, %s62
    %s65 = sphi 0, %s64
    %s79 = sphi 0, %s65
    %s83 = sphi 0, %s83
    %s85 = sphi 0, %s83
    %s86 = sphi 0, %s85
    %s100 = sphi 0, %s86
    %s104 = sphi 0, %s104
    %s106 = sphi 0, %s104
    %s107 = sphi 0, %s106
    %s121 = sphi 0, %s107
    %s125 = sphi 0, %s125
    %s127 = sphi 0, %s125
    %s128 = sphi 0, %s127
    %s142 = sphi 0, %s128
    %s150 = sphi 0, %s152
    %s153 = sphi 0, %s150
    %s154 = sphi 0, %s153
    %s170 = sphi 0, %s154
    %s178 = sphi 0, %s180
    %s181 = sphi 0, %s178
    %s182 = sphi 0, %s181
    %s198 = sphi 0, %s182
    %s206 = sphi 0, %s208
    %s209 = sphi 0, %s206
    %s210 = sphi 0, %s209
    %s226 = sphi 0, %s210
  $region4: #{bert_lss_forward.4} parent=0 // loop_header_branch
    %17 = sbr.rel (%p15) target = $region8
  $region5: #{bert_lss_forward.4} parent=0 // loop_body
    %s19 = ssub.s32 %s14, 1
    %s20 = ssub.s32 %s14, 2
    %s27 = sadd.s32 1, %s22
    %p28 = scmp.ge.s32.totalorder %s27, 1
    %s29 = scalar_select %p28, 0, %s27
    %s30 = sadd.s32 1, %s21
    %s31 = scalar_select %p28, %s30, %s21
    %p32 = scmp.ge.s32.totalorder %s31, 2
    %s33 = scalar_select %p32, 0, %s31
    %s34 = ssub.s32 %s21, %s33
    %s35 = ssub.s32 %s22, %s29
    %s36 = sor.u32 %s34, %s35
    %p37 = scmp.eq.s32.totalorder %s36, 0
    %s39 = sadd.s32 %s38, 1
    %s40 = scalar_select %p37, %s38, %s39
    %p43 = pneg %p37
    %p44 = scmp.eq.s32.totalorder %s14, 1
    %p45 = por %p43, %p44
    %p46 = scmp.ne.s32.totalorder %s38, %s41
    %p47 = scmp.eq.s32.totalorder %s14, 0
    %p48 = por %p46, %p47
    %p49 = scmp.ne.s32.totalorder %s38, %s41
    %p50 = scmp.eq.s32.totalorder %s19, 1
    %p51 = por %p49, %p50
    %p52 = scmp.ne.s32.totalorder %s41, %s42
    %p53 = scmp.eq.s32.totalorder %s19, 0
    %p54 = por %p52, %p53
    %p55 = scmp.ne.s32.totalorder %s41, %s42
    %p56 = scmp.eq.s32.totalorder %s20, 1
    %p57 = por %p55, %p56
    %p59 = scmp.ne.s32.totalorder %s42, %s58
    %p60 = scmp.eq.s32.totalorder %s20, 0
    %p61 = por %p59, %p60
    %s63 = sadd.s32 %s62, 1
    %p66 = scmp.eq.s32.totalorder %s14, 1
    %p67 = scmp.ne.s32.totalorder %s62, %s64
    %p68 = scmp.eq.s32.totalorder %s14, 0
    %p69 = por %p67, %p68
    %p70 = scmp.ne.s32.totalorder %s62, %s64
    %p71 = scmp.eq.s32.totalorder %s19, 1
    %p72 = por %p70, %p71
    %p73 = scmp.ne.s32.totalorder %s64, %s65
    %p74 = scmp.eq.s32.totalorder %s19, 0
    %p75 = por %p73, %p74
    %p76 = scmp.ne.s32.totalorder %s64, %s65
    %p77 = scmp.eq.s32.totalorder %s20, 1
    %p78 = por %p76, %p77
    %p80 = scmp.ne.s32.totalorder %s65, %s79
    %p81 = scmp.eq.s32.totalorder %s20, 0
    %p82 = por %p80, %p81
    %s84 = sadd.s32 %s83, 1
    %p87 = scmp.eq.s32.totalorder %s14, 1
    %p88 = scmp.ne.s32.totalorder %s83, %s85
    %p89 = scmp.eq.s32.totalorder %s14, 0
    %p90 = por %p88, %p89
    %p91 = scmp.ne.s32.totalorder %s83, %s85
    %p92 = scmp.eq.s32.totalorder %s19, 1
    %p93 = por %p91, %p92
    %p94 = scmp.ne.s32.totalorder %s85, %s86
    %p95 = scmp.eq.s32.totalorder %s19, 0
    %p96 = por %p94, %p95
    %p97 = scmp.ne.s32.totalorder %s85, %s86
    %p98 = scmp.eq.s32.totalorder %s20, 1
    %p99 = por %p97, %p98
    %p101 = scmp.ne.s32.totalorder %s86, %s100
    %p102 = scmp.eq.s32.totalorder %s20, 0
    %p103 = por %p101, %p102
    %s105 = sadd.s32 %s104, 1
    %p108 = scmp.eq.s32.totalorder %s14, 1
    %p109 = scmp.ne.s32.totalorder %s104, %s106
    %p110 = scmp.eq.s32.totalorder %s14, 0
    %p111 = por %p109, %p110
    %p112 = scmp.ne.s32.totalorder %s104, %s106
    %p113 = scmp.eq.s32.totalorder %s19, 1
    %p114 = por %p112, %p113
    %p115 = scmp.ne.s32.totalorder %s106, %s107
    %p116 = scmp.eq.s32.totalorder %s19, 0
    %p117 = por %p115, %p116
    %p118 = scmp.ne.s32.totalorder %s106, %s107
    %p119 = scmp.eq.s32.totalorder %s20, 1
    %p120 = por %p118, %p119
    %p122 = scmp.ne.s32.totalorder %s107, %s121
    %p123 = scmp.eq.s32.totalorder %s20, 0
    %p124 = por %p122, %p123
    %s126 = sadd.s32 %s125, 1
    %p129 = scmp.eq.s32.totalorder %s14, 1
    %p130 = scmp.ne.s32.totalorder %s125, %s127
    %p131 = scmp.eq.s32.totalorder %s14, 0
    %p132 = por %p130, %p131
    %p133 = scmp.ne.s32.totalorder %s125, %s127
    %p134 = scmp.eq.s32.totalorder %s19, 1
    %p135 = por %p133, %p134
    %p136 = scmp.ne.s32.totalorder %s127, %s128
    %p137 = scmp.eq.s32.totalorder %s19, 0
    %p138 = por %p136, %p137
    %p139 = scmp.ne.s32.totalorder %s127, %s128
    %p140 = scmp.eq.s32.totalorder %s20, 1
    %p141 = por %p139, %p140
    %p143 = scmp.ne.s32.totalorder %s128, %s142
    %p144 = scmp.eq.s32.totalorder %s20, 0
    %p145 = por %p143, %p144
    %s146 = ssub.s32 %s21, %s33
    %s147 = ssub.s32 %s22, %s29
    %s148 = sor.u32 %s146, %s147
    %p149 = scmp.eq.s32.totalorder %s148, 0
    %s151 = sadd.s32 %s150, 1
    %s152 = scalar_select %p149, %s150, %s151
    %p155 = pneg %p149
    %p156 = scmp.eq.s32.totalorder %s14, 1
    %p157 = por %p155, %p156
    %p158 = scmp.ne.s32.totalorder %s150, %s153
    %p159 = scmp.eq.s32.totalorder %s14, 0
    %p160 = por %p158, %p159
    %p161 = scmp.ne.s32.totalorder %s150, %s153
    %p162 = scmp.eq.s32.totalorder %s19, 1
    %p163 = por %p161, %p162
    %p164 = scmp.ne.s32.totalorder %s153, %s154
    %p165 = scmp.eq.s32.totalorder %s19, 0
    %p166 = por %p164, %p165
    %p167 = scmp.ne.s32.totalorder %s153, %s154
    %p168 = scmp.eq.s32.totalorder %s20, 1
    %p169 = por %p167, %p168
    %p171 = scmp.ne.s32.totalorder %s154, %s170
    %p172 = scmp.eq.s32.totalorder %s20, 0
    %p173 = por %p171, %p172
    %s174 = ssub.s32 %s21, %s33
    %s175 = ssub.s32 %s22, %s29
    %s176 = sor.u32 %s174, %s175
    %p177 = scmp.eq.s32.totalorder %s176, 0
    %s179 = sadd.s32 %s178, 1
    %s180 = scalar_select %p177, %s178, %s179
    %p183 = pneg %p177
    %p184 = scmp.eq.s32.totalorder %s14, 1
    %p185 = por %p183, %p184
    %p186 = scmp.ne.s32.totalorder %s178, %s181
    %p187 = scmp.eq.s32.totalorder %s14, 0
    %p188 = por %p186, %p187
    %p189 = scmp.ne.s32.totalorder %s178, %s181
    %p190 = scmp.eq.s32.totalorder %s19, 1
    %p191 = por %p189, %p190
    %p192 = scmp.ne.s32.totalorder %s181, %s182
    %p193 = scmp.eq.s32.totalorder %s19, 0
    %p194 = por %p192, %p193
    %p195 = scmp.ne.s32.totalorder %s181, %s182
    %p196 = scmp.eq.s32.totalorder %s20, 1
    %p197 = por %p195, %p196
    %p199 = scmp.ne.s32.totalorder %s182, %s198
    %p200 = scmp.eq.s32.totalorder %s20, 0
    %p201 = por %p199, %p200
    %s202 = ssub.s32 %s21, %s33
    %s203 = ssub.s32 %s22, %s29
    %s204 = sor.u32 %s202, %s203
    %p205 = scmp.eq.s32.totalorder %s204, 0
    %s207 = sadd.s32 %s206, 1
    %s208 = scalar_select %p205, %s206, %s207
    %p211 = pneg %p205
    %p212 = scmp.eq.s32.totalorder %s14, 1
    %p213 = por %p211, %p212
    %p214 = scmp.ne.s32.totalorder %s206, %s209
    %p215 = scmp.eq.s32.totalorder %s14, 0
    %p216 = por %p214, %p215
    %p217 = scmp.ne.s32.totalorder %s206, %s209
    %p218 = scmp.eq.s32.totalorder %s19, 1
    %p219 = por %p217, %p218
    %p220 = scmp.ne.s32.totalorder %s209, %s210
    %p221 = scmp.eq.s32.totalorder %s19, 0
    %p222 = por %p220, %p221
    %p223 = scmp.ne.s32.totalorder %s209, %s210
    %p224 = scmp.eq.s32.totalorder %s20, 1
    %p225 = por %p223, %p224
    %p227 = scmp.ne.s32.totalorder %s210, %s226
    %p228 = scmp.eq.s32.totalorder %s20, 0
    %p229 = por %p227, %p228
    %p230 = scmp.le.s32.totalorder 1, %s14
    %p231 = scmp.lt.s32.totalorder %s14, 3
    %p232 = pnand %p230, %p231
    %p233 = pneg %p232
    // Predicated region
    $region9: #{bert_lss_forward.4} parent=5 // pred_check
      _
    $region10: #{bert_lss_forward.4} parent=5 // pred_check_branch
      %235 = sbr.rel (%p232) target = $region12
    $region11: #{bert_lss_forward.4} parent=5 // pred_region
      %s236 = ssub.s32 %s14, 1
      // Predicated region
      $region13: #{bert_lss_forward.4} parent=11 // pred_check
        %p237 = pneg %p75
      $region14: #{bert_lss_forward.4} parent=11 // pred_check_branch
        %239 = sbr.rel (%p237) target = $region16
      $region15: #{bert_lss_forward.4} parent=11 // pred_region
        _
      $region16: #{bert_lss_forward.4} parent=11 // pred_fallthru
        _
      // Predicated region
      $region17: #{bert_lss_forward.4} parent=11 // pred_check
        %p240 = pneg %p96
      $region18: #{bert_lss_forward.4} parent=11 // pred_check_branch
        %242 = sbr.rel (%p240) target = $region20
      $region19: #{bert_lss_forward.4} parent=11 // pred_region
        _
      $region20: #{bert_lss_forward.4} parent=11 // pred_fallthru
        _
      // Predicated region
      $region21: #{bert_lss_forward.4} parent=11 // pred_check
        %p243 = pneg %p117
      $region22: #{bert_lss_forward.4} parent=11 // pred_check_branch
        %245 = sbr.rel (%p243) target = $region24
      $region23: #{bert_lss_forward.4} parent=11 // pred_region
        _
      $region24: #{bert_lss_forward.4} parent=11 // pred_fallthru
        _
      // Predicated region
      $region25: #{bert_lss_forward.4} parent=11 // pred_check
        %p246 = pneg %p138
      $region26: #{bert_lss_forward.4} parent=11 // pred_check_branch
        %248 = sbr.rel (%p246) target = $region28
      $region27: #{bert_lss_forward.4} parent=11 // pred_region
        _
      $region28: #{bert_lss_forward.4} parent=11 // pred_fallthru
        _
    $region12: #{bert_lss_forward.4} parent=5 // pred_fallthru
      _
    %p249 = scmp.lt.s32.totalorder %s14, 2
    // Predicated region
    $region29: #{bert_lss_forward.4} parent=5 // pred_check
      %p250 = pneg %p249
    $region30: #{bert_lss_forward.4} parent=5 // pred_check_branch
      %252 = sbr.rel (%p250) target = $region32
    $region31: #{bert_lss_forward.4} parent=5 // pred_region
      // Predicated region
      $region33: #{bert_lss_forward.4} parent=31 // pred_check
        %p253 = pneg %p48
      $region34: #{bert_lss_forward.4} parent=31 // pred_check_branch
        %255 = sbr.rel (%p253) target = $region36
      $region35: #{bert_lss_forward.4} parent=31 // pred_region
        %p256 = scmp.lt.s32.totalorder %s21, 1
        %s257 = scalar_select %p256, %s21, 1
        %p258 = scmp.lt.s32.totalorder %s22, 0
        %s259 = scalar_select %p258, %s22, 0
        %s260 = sadd.s32 %s259, %s257
        %s261 = smul.addr %s260, 4
        %s262 = scalar_lea.vmem %s0, %s261
      $region36: #{bert_lss_forward.4} parent=31 // pred_fallthru
        _
    $region32: #{bert_lss_forward.4} parent=5 // pred_fallthru
      _
    %p263 = scmp.le.s32.totalorder 1, %s14
    %p264 = scmp.lt.s32.totalorder %s14, 3
    %p265 = pnand %p263, %p264
    %p266 = pneg %p265
    // Predicated region
    $region37: #{bert_lss_forward.4} parent=5 // pred_check
      _
    $region38: #{bert_lss_forward.4} parent=5 // pred_check_branch
      %268 = sbr.rel (%p265) target = $region40
    $region39: #{bert_lss_forward.4} parent=5 // pred_region
      %s269 = ssub.s32 %s14, 1
      %p270 = scmp.lt.s32.totalorder %s23, 1
      %s271 = scalar_select %p270, %s23, 1
      %p272 = scmp.lt.s32.totalorder %s24, 0
      %s273 = scalar_select %p272, %s24, 0
      %s274 = sadd.s32 %s273, %s271
      %s275 = smul.addr %s274, 4
      %s276 = scalar_lea.vmem %s0, %s275
      %p277 = pneg %p54
      %p278 = pneg %p51
      %p279 = pneg %p75
      %p280 = pneg %p72
      %p281 = pneg %p96
      %p282 = pneg %p93
      %p283 = pneg %p117
      %p284 = pneg %p114
      %p285 = pneg %p138
      %p286 = pneg %p135
      %p287 = pneg %p166
      %p288 = pneg %p163
      %p289 = scmp.lt.s32.totalorder %s23, 1
      %s290 = scalar_select %p289, %s23, 1
      %p291 = scmp.lt.s32.totalorder %s24, 0
      %s292 = scalar_select %p291, %s24, 0
      %s293 = sadd.s32 %s292, %s290
      %s294 = smul.addr %s293, 4
      %s295 = scalar_lea.vmem %s5, %s294
      %p296 = pneg %p194
      %p297 = pneg %p191
      %p298 = scmp.lt.s32.totalorder %s23, 1
      %s299 = scalar_select %p298, %s23, 1
      %p300 = scmp.lt.s32.totalorder %s24, 0
      %s301 = scalar_select %p300, %s24, 0
      %s302 = smul.addr %s299, 4
      %s303 = sadd.s32 %s301, %s302
      %s304 = smul.addr %s303, 4
      %s305 = scalar_lea.vmem %s6, %s304
      %p306 = pneg %p222
      %p307 = pneg %p219
      %p308 = scmp.lt.s32.totalorder %s23, 1
      %s309 = scalar_select %p308, %s23, 1
      %p310 = scmp.lt.s32.totalorder %s24, 0
      %s311 = scalar_select %p310, %s24, 0
      %s312 = sadd.s32 %s311, %s309
      %s313 = smul.addr %s312, 4
      %s314 = scalar_lea.vmem %s7, %s313
      %p315 = scmp.lt.s32.totalorder %s23, 1
      %s316 = scalar_select %p315, %s23, 1
      %p317 = scmp.lt.s32.totalorder %s24, 0
      %s318 = scalar_select %p317, %s24, 0
      %s319 = sadd.s32 %s318, %s316
      %s320 = smul.addr %s319, 4
      %s321 = scalar_lea.vmem %s0, %s320
      %p322 = scmp.lt.s32.totalorder %s23, 1
      %s323 = scalar_select %p322, %s23, 1
      %p324 = scmp.lt.s32.totalorder %s24, 0
      %s325 = scalar_select %p324, %s24, 0
      %s326 = sadd.s32 %s325, %s323
      %s327 = smul.addr %s326, 4
      %s328 = scalar_lea.vmem %s5, %s327
      %p329 = scmp.lt.s32.totalorder %s23, 1
      %s330 = scalar_select %p329, %s23, 1
      %p331 = scmp.lt.s32.totalorder %s24, 0
      %s332 = scalar_select %p331, %s24, 0
      %s333 = smul.addr %s330, 4
      %s334 = sadd.s32 %s332, %s333
      %s335 = smul.addr %s334, 4
      %s336 = scalar_lea.vmem %s6, %s335
      %p337 = scmp.lt.s32.totalorder %s23, 1
      %s338 = scalar_select %p337, %s23, 1
      %p339 = scmp.lt.s32.totalorder %s24, 0
      %s340 = scalar_select %p339, %s24, 0
      %s341 = sadd.s32 %s340, %s338
      %s342 = smul.addr %s341, 4
      %s343 = scalar_lea.vmem %s7, %s342
      %v345 = vld [vmem:[%s321] sm:$0xf]
      %v346 = vunpack.c.l.bf16 %v345
      %v347 = vld [vmem:[%s1] sm:$0x1]
      %v348 = vld [vmem:[%s2] sm:$0x1]
      %vm349 = vcmask 261120
      %v350 = vsel %vm349, %v346, 0.0
      %351 = vadd.xlane.f32.xlu0 %v350
      %v352 = vpop.xlane.xlu0 %351
      %v353 = vrcp.pop 32.0
      %v354 = vmul.f32 32.0, %v353
      %v355 = vsub.f32 1.0, %v354
      %v356 = vmul.f32 %v353, %v355
      %v357 = vadd.f32 %v353, %v356
      %vm358 = vweird.f32 %v353
      %v359 = vsel %vm358, %v353, %v357
      %v360 = vmul.f32 %v352, %v359
      %v361 = vsub.f32 %v346, %v360
      %v362 = vmul.f32 %v361, %v361
      %v363 = vsel %vm349, %v362, 0.0
      %364 = vadd.xlane.f32.xlu0 %v363
      %v365 = vpop.xlane.xlu0 %364
      %v366 = vmul.f32 %v365, 0.032258064
      %v367 = vrsqrt.pop %v366
      %v368 = vmul.f32 %v367, %v366
      %v369 = vmul.f32 %v368, %v367
      %v370 = vmul.f32 0.5, %v369
      %v371 = vsub.f32 1.5, %v370
      %v372 = vmul.f32 %v367, %v371
      %v373 = vmul.f32 %v366, %v372
      %vm374 = vcmp.eq.f32.partialorder %v366, inf
      %v375 = vsel %vm374, %v366, %v373
      %vm376 = vcmp.eq.f32.partialorder %v366, 0.0
      %v377 = vand.u32 %v366, 2147483648
      %v378 = vsel %vm376, %v377, %v375
      %v379 = vadd.f32 %v378, 1e-06
      %v380 = vrcp.pop %v379
      %v381 = vmul.f32 %v361, %v380
      %v383 = vperm.slane %v347, 0
      %v385 = vmul.f32 %v381, %v383
      %v387 = vperm.slane %v348, 0
      %v389 = vadd.f32 %v385, %v387
      %v390 = vpack.c.bf16 %v389, %v389
      %v391 = vld [vmem:[%s3] sm:$0xf]
      %v392 = vld [vmem:[%s3 + $0x4] sm:$0xf]
      %v393 = vld [vmem:[%s3 + $0x8] sm:$0xf]
      %v394 = vld [vmem:[%s3 + $0xc] sm:$0xf]
      %v395 = vld [vmem:[%s4] sm:$0x1]
      %v397 = vperm.slane %v395, 0
      %v403 = vunpack.c.l.b16 %v391
      %v404 = vunpack.c.l.b16 %v392
      %v405 = vunpack.c.l.b16 %v393
      %v406 = vunpack.c.l.b16 %v394
      %v407 = vpack.c.b16 %v404, %v403
      %v408 = vpack.c.b16 %v406, %v405
      %v412 = vsel %vm349, %v390, 0
      %414 = vmatpush.bf16.msra.mxu0 0
      %415 = vmatpush.bf16.msra.mxu0 0
      %416 = vmatpush.bf16.msra.mxu0 0
      %417 = vmatpush.bf16.msra.mxu0 0
      %418 = vmatpush.bf16.msra.mxu0 0
      %419 = vmatpush.bf16.msra.mxu0 0
      %420 = vmatpush.bf16.msra.mxu0 %v408
      %421 = vmatpush.bf16.msra.mxu0 %v407
      %422 = vmatmul.bf16.gmra.mxu0 %v412
      %v423 = vpop.f32.mrf.mxu0
      %v424 = vadd.f32 %v397, %v423
      %v425 = vpop.f32.mrf.mxu0
      %426 = vdwg.mxu0
      %v427 = vpack.c.bf16 %v424, %v424
      %vm428 = vcmask 257024
      %429 = vst.msk [vmem:[%s328] sm:$0xf] %vm428, %v427
      %431 = vrot.lane.b32.xlu0 %v424, 96
      %v432 = vpop.permute.xlu0 %431
      %434 = vxpose.xlu0.b32.start [1/16] %v432, 128
      %435 = vxpose.xlu0.b32.cont [2/16] 0.0, 128
      %436 = vxpose.xlu0.b32.cont [3/16] 0.0, 128
      %437 = vxpose.xlu0.b32.cont [4/16] 0.0, 128
      %438 = vxpose.xlu0.b32.cont [5/16] 0.0, 128
      %439 = vxpose.xlu0.b32.cont [6/16] 0.0, 128
      %440 = vxpose.xlu0.b32.cont [7/16] 0.0, 128
      %441 = vxpose.xlu0.b32.cont [8/16] 0.0, 128
      %442 = vxpose.xlu0.b32.cont [9/16] 0.0, 128
      %443 = vxpose.xlu0.b32.cont [10/16] 0.0, 128
      %444 = vxpose.xlu0.b32.cont [11/16] 0.0, 128
      %445 = vxpose.xlu0.b32.cont [12/16] 0.0, 128
      %446 = vxpose.xlu0.b32.cont [13/16] 0.0, 128
      %447 = vxpose.xlu0.b32.cont [14/16] 0.0, 128
      %448 = vxpose.xlu0.b32.cont [15/16] 0.0, 128
      %449 = vxpose.xlu0.b32.end [16/16] 0.0, 128
      %v450 = vpop.trf.xlu0
      %v451 = vpop.trf.xlu0
      %v452 = vpop.trf.xlu0
      %v453 = vpop.trf.xlu0
      %v454 = vpop.trf.xlu0
      %v455 = vpop.trf.xlu0
      %v456 = vpop.trf.xlu0
      %v457 = vpop.trf.xlu0
      %v458 = vpop.trf.xlu0
      %v459 = vpop.trf.xlu0
      %v460 = vpop.trf.xlu0
      %v461 = vpop.trf.xlu0
      %v462 = vpop.trf.xlu0
      %v463 = vpop.trf.xlu0
      %v464 = vpop.trf.xlu0
      %v465 = vpop.trf.xlu0
      %v466 = vpack.c.bf16 %v450, %v450
      %v467 = vpack.c.bf16 %v451, %v451
      %v468 = vpack.c.bf16 %v452, %v452
      %v469 = vpack.c.bf16 %v453, %v453
      %vm470 = vcmask 60416
      %471 = vst.msk [vmem:[%s336] sm:$0xf] %vm470, %v466
      %472 = vst.msk [vmem:[%s336 + $0x4] sm:$0xf] %vm470, %v467
      %473 = vst.msk [vmem:[%s336 + $0x8] sm:$0xf] %vm470, %v468
      %474 = vst.msk [vmem:[%s336 + $0xc] sm:$0xf] %vm470, %v469
      %476 = vrot.lane.b32.xlu0 %v427, 64
      %v477 = vpop.permute.xlu0 %476
      %479 = vst.msk [vmem:[%s343] sm:$0xf] %vm428, %v477
      %p480 = scmp.lt.s32.totalorder %s23, 1
      %s481 = scalar_select %p480, %s23, 1
      %p482 = scmp.lt.s32.totalorder %s24, 0
      %s483 = scalar_select %p482, %s24, 0
      %s484 = sadd.s32 %s483, %s481
      %s485 = smul.addr %s484, 4
      %s486 = scalar_lea.vmem %s5, %s485
      %p487 = scmp.lt.s32.totalorder %s23, 1
      %s488 = scalar_select %p487, %s23, 1
      %p489 = scmp.lt.s32.totalorder %s24, 0
      %s490 = scalar_select %p489, %s24, 0
      %s491 = smul.addr %s488, 4
      %s492 = sadd.s32 %s490, %s491
      %s493 = smul.addr %s492, 4
      %s494 = scalar_lea.vmem %s6, %s493
      %p495 = scmp.lt.s32.totalorder %s23, 1
      %s496 = scalar_select %p495, %s23, 1
      %p497 = scmp.lt.s32.totalorder %s24, 0
      %s498 = scalar_select %p497, %s24, 0
      %s499 = sadd.s32 %s498, %s496
      %s500 = smul.addr %s499, 4
      %s501 = scalar_lea.vmem %s7, %s500
      // Predicated region
      $region41: #{bert_lss_forward.4} parent=39 // pred_check
        %p502 = pneg %p163
      $region42: #{bert_lss_forward.4} parent=39 // pred_check_branch
        %504 = sbr.rel (%p502) target = $region44
      $region43: #{bert_lss_forward.4} parent=39 // pred_region
        _
      $region44: #{bert_lss_forward.4} parent=39 // pred_fallthru
        _
      // Predicated region
      $region45: #{bert_lss_forward.4} parent=39 // pred_check
        %p505 = pneg %p191
      $region46: #{bert_lss_forward.4} parent=39 // pred_check_branch
        %507 = sbr.rel (%p505) target = $region48
      $region47: #{bert_lss_forward.4} parent=39 // pred_region
        _
      $region48: #{bert_lss_forward.4} parent=39 // pred_fallthru
        _
      // Predicated region
      $region49: #{bert_lss_forward.4} parent=39 // pred_check
        %p508 = pneg %p219
      $region50: #{bert_lss_forward.4} parent=39 // pred_check_branch
        %510 = sbr.rel (%p508) target = $region52
      $region51: #{bert_lss_forward.4} parent=39 // pred_region
        _
      $region52: #{bert_lss_forward.4} parent=39 // pred_fallthru
        _
    $region40: #{bert_lss_forward.4} parent=5 // pred_fallthru
      _
    %p511 = scmp.le.s32.totalorder 2, %s14
    // Predicated region
    $region53: #{bert_lss_forward.4} parent=5 // pred_check
      %p512 = pneg %p511
    $region54: #{bert_lss_forward.4} parent=5 // pred_check_branch
      %514 = sbr.rel (%p512) target = $region56
    $region55: #{bert_lss_forward.4} parent=5 // pred_region
      %s515 = ssub.s32 %s14, 2
      // Predicated region
      $region57: #{bert_lss_forward.4} parent=55 // pred_check
        %p516 = pneg %p169
      $region58: #{bert_lss_forward.4} parent=55 // pred_check_branch
        %518 = sbr.rel (%p516) target = $region60
      $region59: #{bert_lss_forward.4} parent=55 // pred_region
        %p519 = scmp.lt.s32.totalorder %s25, 1
        %s520 = scalar_select %p519, %s25, 1
        %p521 = scmp.lt.s32.totalorder %s26, 0
        %s522 = scalar_select %p521, %s26, 0
        %s523 = sadd.s32 %s522, %s520
        %s524 = smul.addr %s523, 4
        %s525 = scalar_lea.vmem %s5, %s524
      $region60: #{bert_lss_forward.4} parent=55 // pred_fallthru
        _
      // Predicated region
      $region61: #{bert_lss_forward.4} parent=55 // pred_check
        %p526 = pneg %p197
      $region62: #{bert_lss_forward.4} parent=55 // pred_check_branch
        %528 = sbr.rel (%p526) target = $region64
      $region63: #{bert_lss_forward.4} parent=55 // pred_region
        %p529 = scmp.lt.s32.totalorder %s25, 1
        %s530 = scalar_select %p529, %s25, 1
        %p531 = scmp.lt.s32.totalorder %s26, 0
        %s532 = scalar_select %p531, %s26, 0
        %s533 = smul.addr %s530, 4
        %s534 = sadd.s32 %s532, %s533
        %s535 = smul.addr %s534, 4
        %s536 = scalar_lea.vmem %s6, %s535
      $region64: #{bert_lss_forward.4} parent=55 // pred_fallthru
        _
      // Predicated region
      $region65: #{bert_lss_forward.4} parent=55 // pred_check
        %p537 = pneg %p225
      $region66: #{bert_lss_forward.4} parent=55 // pred_check_branch
        %539 = sbr.rel (%p537) target = $region68
      $region67: #{bert_lss_forward.4} parent=55 // pred_region
        %p540 = scmp.lt.s32.totalorder %s25, 1
        %s541 = scalar_select %p540, %s25, 1
        %p542 = scmp.lt.s32.totalorder %s26, 0
        %s543 = scalar_select %p542, %s26, 0
        %s544 = sadd.s32 %s543, %s541
        %s545 = smul.addr %s544, 4
        %s546 = scalar_lea.vmem %s7, %s545
      $region68: #{bert_lss_forward.4} parent=55 // pred_fallthru
        _
    $region56: #{bert_lss_forward.4} parent=5 // pred_fallthru
      _
  $region6: #{bert_lss_forward.4} parent=0 // loop_footer
    %s18 = sadd.s32 1, %s14
  $region7: #{bert_lss_forward.4} parent=0 // loop_footer_branch
    %13 = sbr.rel target = $region3
  $region8: #{bert_lss_forward.4} parent=0 // loop_exit
    _

// kernel: bert_lss_forward.5
$region0: #{bert_lss_forward.5}
  #allocation0 [shape = 'u32[]', space=smem, size = 0x4, offset = 0x4, fixed_abs, tag = 'smem constant byte address 0x4 - core index']
  #allocation1 [shape = 'u32[72,128]{1,0:T(1,128)}', space=vmem, size = 0x9000, scoped, tag = 'internal scratch']
  %s0 = inlined_call_operand.vmem [shape: bf16[2,8,32], index: 0, kind: input, shape index: {}]
  %s1 = inlined_call_operand.vmem [shape: bf16[2,8,32], index: 1, kind: input, shape index: {}]
  %s2 = inlined_call_operand.vmem [shape: bf16[2,32,8], index: 2, kind: input, shape index: {}]
  %s3 = inlined_call_operand.vmem [shape: bf16[2,8,32], index: 3, kind: input, shape index: {}]
  %s4 = inlined_call_operand.vmem [shape: f32[2,1,8], index: 4, kind: input, shape index: {}]
  %s5 = inlined_call_operand.vmem [shape: bf16[4,8,32], index: 5, kind: input, shape index: {}]
  %s6 = inlined_call_operand.vmem [shape: f32[1,32], index: 6, kind: input, shape index: {}]
  %s7 = inlined_call_operand.vmem [shape: f32[1,32], index: 7, kind: input, shape index: {}]
  %s8 = inlined_call_operand.vmem [shape: f32[1,32], index: 8, kind: input, shape index: {}]
  %s9 = inlined_call_operand.vmem [shape: bf16[32,128], index: 9, kind: input, shape index: {}]
  %s10 = inlined_call_operand.vmem [shape: f32[1,128], index: 10, kind: input, shape index: {}]
  %s11 = inlined_call_operand.vmem [shape: bf16[128,32], index: 11, kind: input, shape index: {}]
  %s12 = inlined_call_operand.vmem [shape: f32[1,32], index: 12, kind: input, shape index: {}]
  %s13 = inlined_call_operand.vmem [shape: bf16[2,8,32], index: 13, kind: output, shape index: {}]
  %s14 = sld [smem:[#allocation0]]
  $region85: #{bert_lss_forward.5} parent=0
    _
  %s16 = ssub.s32 1, %s14
  %s17 = scalar_select 0, %s16, %s14
  loop: start=0, step=1, limit=4
  $region2: #{bert_lss_forward.5} parent=0 // loop_pre_header
    _
  $region3: #{bert_lss_forward.5} parent=0 // loop_header
    %s19 = sphi 0, %s23
    %p20 = scmp.ge.s32.totalorder %s19, 4
    %s26 = sphi 0, %s38
    %s27 = sphi 0, %s34
    %s28 = sphi 0, %s26
    %s29 = sphi 0, %s27
    %s30 = sphi 0, %s28
    %s31 = sphi 0, %s29
    %s43 = sphi 0, %s45
    %s46 = sphi 0, %s43
    %s47 = sphi 0, %s46
    %s63 = sphi 0, %s47
    %s71 = sphi 0, %s73
    %s74 = sphi 0, %s71
    %s75 = sphi 0, %s74
    %s91 = sphi 0, %s75
    %s97 = sphi 0, %s99
    %s100 = sphi 0, %s97
    %s101 = sphi 0, %s100
    %s117 = sphi 0, %s101
    %s123 = sphi 0, %s125
    %s126 = sphi 0, %s123
    %s127 = sphi 0, %s126
    %s143 = sphi 0, %s127
    %s149 = sphi 0, %s151
    %s152 = sphi 0, %s149
    %s153 = sphi 0, %s152
    %s169 = sphi 0, %s153
    %s173 = sphi 0, %s173
    %s175 = sphi 0, %s173
    %s176 = sphi 0, %s175
    %s190 = sphi 0, %s176
    %s194 = sphi 0, %s194
    %s196 = sphi 0, %s194
    %s197 = sphi 0, %s196
    %s211 = sphi 0, %s197
    %s215 = sphi 0, %s215
    %s217 = sphi 0, %s215
    %s218 = sphi 0, %s217
    %s232 = sphi 0, %s218
    %s236 = sphi 0, %s236
    %s238 = sphi 0, %s236
    %s239 = sphi 0, %s238
    %s253 = sphi 0, %s239
    %s257 = sphi 0, %s257
    %s259 = sphi 0, %s257
    %s260 = sphi 0, %s259
    %s274 = sphi 0, %s260
    %s278 = sphi 0, %s278
    %s280 = sphi 0, %s278
    %s281 = sphi 0, %s280
    %s295 = sphi 0, %s281
    %s299 = sphi 0, %s299
    %s301 = sphi 0, %s299
    %s302 = sphi 0, %s301
    %s316 = sphi 0, %s302
    %s320 = sphi 0, %s320
    %s322 = sphi 0, %s320
    %s323 = sphi 0, %s322
    %s337 = sphi 0, %s323
    %s345 = sphi 0, %s347
    %s348 = sphi 0, %s345
    %s349 = sphi 0, %s348
    %s365 = sphi 0, %s349
  $region4: #{bert_lss_forward.5} parent=0 // loop_header_branch
    %22 = sbr.rel (%p20) target = $region8
  $region5: #{bert_lss_forward.5} parent=0 // loop_body
    %s24 = ssub.s32 %s19, 1
    %s25 = ssub.s32 %s19, 2
    %s32 = sadd.s32 1, %s27
    %p33 = scmp.ge.s32.totalorder %s32, 1
    %s34 = scalar_select %p33, 0, %s32
    %s35 = sadd.s32 1, %s26
    %s36 = scalar_select %p33, %s35, %s26
    %p37 = scmp.ge.s32.totalorder %s36, 2
    %s38 = scalar_select %p37, 0, %s36
    %s39 = ssub.s32 %s26, %s38
    %s40 = ssub.s32 %s27, %s34
    %s41 = sor.u32 %s39, %s40
    %p42 = scmp.eq.s32.totalorder %s41, 0
    %s44 = sadd.s32 %s43, 1
    %s45 = scalar_select %p42, %s43, %s44
    %p48 = pneg %p42
    %p49 = scmp.eq.s32.totalorder %s19, 1
    %p50 = por %p48, %p49
    %p51 = scmp.ne.s32.totalorder %s43, %s46
    %p52 = scmp.eq.s32.totalorder %s19, 0
    %p53 = por %p51, %p52
    %p54 = scmp.ne.s32.totalorder %s43, %s46
    %p55 = scmp.eq.s32.totalorder %s24, 1
    %p56 = por %p54, %p55
    %p57 = scmp.ne.s32.totalorder %s46, %s47
    %p58 = scmp.eq.s32.totalorder %s24, 0
    %p59 = por %p57, %p58
    %p60 = scmp.ne.s32.totalorder %s46, %s47
    %p61 = scmp.eq.s32.totalorder %s25, 1
    %p62 = por %p60, %p61
    %p64 = scmp.ne.s32.totalorder %s47, %s63
    %p65 = scmp.eq.s32.totalorder %s25, 0
    %p66 = por %p64, %p65
    %s67 = ssub.s32 %s26, %s38
    %s68 = ssub.s32 %s27, %s34
    %s69 = sor.u32 %s67, %s68
    %p70 = scmp.eq.s32.totalorder %s69, 0
    %s72 = sadd.s32 %s71, 1
    %s73 = scalar_select %p70, %s71, %s72
    %p76 = pneg %p70
    %p77 = scmp.eq.s32.totalorder %s19, 1
    %p78 = por %p76, %p77
    %p79 = scmp.ne.s32.totalorder %s71, %s74
    %p80 = scmp.eq.s32.totalorder %s19, 0
    %p81 = por %p79, %p80
    %p82 = scmp.ne.s32.totalorder %s71, %s74
    %p83 = scmp.eq.s32.totalorder %s24, 1
    %p84 = por %p82, %p83
    %p85 = scmp.ne.s32.totalorder %s74, %s75
    %p86 = scmp.eq.s32.totalorder %s24, 0
    %p87 = por %p85, %p86
    %p88 = scmp.ne.s32.totalorder %s74, %s75
    %p89 = scmp.eq.s32.totalorder %s25, 1
    %p90 = por %p88, %p89
    %p92 = scmp.ne.s32.totalorder %s75, %s91
    %p93 = scmp.eq.s32.totalorder %s25, 0
    %p94 = por %p92, %p93
    %s95 = ssub.s32 %s26, %s38
    %p96 = scmp.eq.s32.totalorder %s95, 0
    %s98 = sadd.s32 %s97, 1
    %s99 = scalar_select %p96, %s97, %s98
    %p102 = pneg %p96
    %p103 = scmp.eq.s32.totalorder %s19, 1
    %p104 = por %p102, %p103
    %p105 = scmp.ne.s32.totalorder %s97, %s100
    %p106 = scmp.eq.s32.totalorder %s19, 0
    %p107 = por %p105, %p106
    %p108 = scmp.ne.s32.totalorder %s97, %s100
    %p109 = scmp.eq.s32.totalorder %s24, 1
    %p110 = por %p108, %p109
    %p111 = scmp.ne.s32.totalorder %s100, %s101
    %p112 = scmp.eq.s32.totalorder %s24, 0
    %p113 = por %p111, %p112
    %p114 = scmp.ne.s32.totalorder %s100, %s101
    %p115 = scmp.eq.s32.totalorder %s25, 1
    %p116 = por %p114, %p115
    %p118 = scmp.ne.s32.totalorder %s101, %s117
    %p119 = scmp.eq.s32.totalorder %s25, 0
    %p120 = por %p118, %p119
    %s121 = ssub.s32 %s26, %s38
    %p122 = scmp.eq.s32.totalorder %s121, 0
    %s124 = sadd.s32 %s123, 1
    %s125 = scalar_select %p122, %s123, %s124
    %p128 = pneg %p122
    %p129 = scmp.eq.s32.totalorder %s19, 1
    %p130 = por %p128, %p129
    %p131 = scmp.ne.s32.totalorder %s123, %s126
    %p132 = scmp.eq.s32.totalorder %s19, 0
    %p133 = por %p131, %p132
    %p134 = scmp.ne.s32.totalorder %s123, %s126
    %p135 = scmp.eq.s32.totalorder %s24, 1
    %p136 = por %p134, %p135
    %p137 = scmp.ne.s32.totalorder %s126, %s127
    %p138 = scmp.eq.s32.totalorder %s24, 0
    %p139 = por %p137, %p138
    %p140 = scmp.ne.s32.totalorder %s126, %s127
    %p141 = scmp.eq.s32.totalorder %s25, 1
    %p142 = por %p140, %p141
    %p144 = scmp.ne.s32.totalorder %s127, %s143
    %p145 = scmp.eq.s32.totalorder %s25, 0
    %p146 = por %p144, %p145
    %s147 = ssub.s32 %s26, %s38
    %p148 = scmp.eq.s32.totalorder %s147, 0
    %s150 = sadd.s32 %s149, 1
    %s151 = scalar_select %p148, %s149, %s150
    %p154 = pneg %p148
    %p155 = scmp.eq.s32.totalorder %s19, 1
    %p156 = por %p154, %p155
    %p157 = scmp.ne.s32.totalorder %s149, %s152
    %p158 = scmp.eq.s32.totalorder %s19, 0
    %p159 = por %p157, %p158
    %p160 = scmp.ne.s32.totalorder %s149, %s152
    %p161 = scmp.eq.s32.totalorder %s24, 1
    %p162 = por %p160, %p161
    %p163 = scmp.ne.s32.totalorder %s152, %s153
    %p164 = scmp.eq.s32.totalorder %s24, 0
    %p165 = por %p163, %p164
    %p166 = scmp.ne.s32.totalorder %s152, %s153
    %p167 = scmp.eq.s32.totalorder %s25, 1
    %p168 = por %p166, %p167
    %p170 = scmp.ne.s32.totalorder %s153, %s169
    %p171 = scmp.eq.s32.totalorder %s25, 0
    %p172 = por %p170, %p171
    %s174 = sadd.s32 %s173, 1
    %p177 = scmp.eq.s32.totalorder %s19, 1
    %p178 = scmp.ne.s32.totalorder %s173, %s175
    %p179 = scmp.eq.s32.totalorder %s19, 0
    %p180 = por %p178, %p179
    %p181 = scmp.ne.s32.totalorder %s173, %s175
    %p182 = scmp.eq.s32.totalorder %s24, 1
    %p183 = por %p181, %p182
    %p184 = scmp.ne.s32.totalorder %s175, %s176
    %p185 = scmp.eq.s32.totalorder %s24, 0
    %p186 = por %p184, %p185
    %p187 = scmp.ne.s32.totalorder %s175, %s176
    %p188 = scmp.eq.s32.totalorder %s25, 1
    %p189 = por %p187, %p188
    %p191 = scmp.ne.s32.totalorder %s176, %s190
    %p192 = scmp.eq.s32.totalorder %s25, 0
    %p193 = por %p191, %p192
    %s195 = sadd.s32 %s194, 1
    %p198 = scmp.eq.s32.totalorder %s19, 1
    %p199 = scmp.ne.s32.totalorder %s194, %s196
    %p200 = scmp.eq.s32.totalorder %s19, 0
    %p201 = por %p199, %p200
    %p202 = scmp.ne.s32.totalorder %s194, %s196
    %p203 = scmp.eq.s32.totalorder %s24, 1
    %p204 = por %p202, %p203
    %p205 = scmp.ne.s32.totalorder %s196, %s197
    %p206 = scmp.eq.s32.totalorder %s24, 0
    %p207 = por %p205, %p206
    %p208 = scmp.ne.s32.totalorder %s196, %s197
    %p209 = scmp.eq.s32.totalorder %s25, 1
    %p210 = por %p208, %p209
    %p212 = scmp.ne.s32.totalorder %s197, %s211
    %p213 = scmp.eq.s32.totalorder %s25, 0
    %p214 = por %p212, %p213
    %s216 = sadd.s32 %s215, 1
    %p219 = scmp.eq.s32.totalorder %s19, 1
    %p220 = scmp.ne.s32.totalorder %s215, %s217
    %p221 = scmp.eq.s32.totalorder %s19, 0
    %p222 = por %p220, %p221
    %p223 = scmp.ne.s32.totalorder %s215, %s217
    %p224 = scmp.eq.s32.totalorder %s24, 1
    %p225 = por %p223, %p224
    %p226 = scmp.ne.s32.totalorder %s217, %s218
    %p227 = scmp.eq.s32.totalorder %s24, 0
    %p228 = por %p226, %p227
    %p229 = scmp.ne.s32.totalorder %s217, %s218
    %p230 = scmp.eq.s32.totalorder %s25, 1
    %p231 = por %p229, %p230
    %p233 = scmp.ne.s32.totalorder %s218, %s232
    %p234 = scmp.eq.s32.totalorder %s25, 0
    %p235 = por %p233, %p234
    %s237 = sadd.s32 %s236, 1
    %p240 = scmp.eq.s32.totalorder %s19, 1
    %p241 = scmp.ne.s32.totalorder %s236, %s238
    %p242 = scmp.eq.s32.totalorder %s19, 0
    %p243 = por %p241, %p242
    %p244 = scmp.ne.s32.totalorder %s236, %s238
    %p245 = scmp.eq.s32.totalorder %s24, 1
    %p246 = por %p244, %p245
    %p247 = scmp.ne.s32.totalorder %s238, %s239
    %p248 = scmp.eq.s32.totalorder %s24, 0
    %p249 = por %p247, %p248
    %p250 = scmp.ne.s32.totalorder %s238, %s239
    %p251 = scmp.eq.s32.totalorder %s25, 1
    %p252 = por %p250, %p251
    %p254 = scmp.ne.s32.totalorder %s239, %s253
    %p255 = scmp.eq.s32.totalorder %s25, 0
    %p256 = por %p254, %p255
    %s258 = sadd.s32 %s257, 1
    %p261 = scmp.eq.s32.totalorder %s19, 1
    %p262 = scmp.ne.s32.totalorder %s257, %s259
    %p263 = scmp.eq.s32.totalorder %s19, 0
    %p264 = por %p262, %p263
    %p265 = scmp.ne.s32.totalorder %s257, %s259
    %p266 = scmp.eq.s32.totalorder %s24, 1
    %p267 = por %p265, %p266
    %p268 = scmp.ne.s32.totalorder %s259, %s260
    %p269 = scmp.eq.s32.totalorder %s24, 0
    %p270 = por %p268, %p269
    %p271 = scmp.ne.s32.totalorder %s259, %s260
    %p272 = scmp.eq.s32.totalorder %s25, 1
    %p273 = por %p271, %p272
    %p275 = scmp.ne.s32.totalorder %s260, %s274
    %p276 = scmp.eq.s32.totalorder %s25, 0
    %p277 = por %p275, %p276
    %s279 = sadd.s32 %s278, 1
    %p282 = scmp.eq.s32.totalorder %s19, 1
    %p283 = scmp.ne.s32.totalorder %s278, %s280
    %p284 = scmp.eq.s32.totalorder %s19, 0
    %p285 = por %p283, %p284
    %p286 = scmp.ne.s32.totalorder %s278, %s280
    %p287 = scmp.eq.s32.totalorder %s24, 1
    %p288 = por %p286, %p287
    %p289 = scmp.ne.s32.totalorder %s280, %s281
    %p290 = scmp.eq.s32.totalorder %s24, 0
    %p291 = por %p289, %p290
    %p292 = scmp.ne.s32.totalorder %s280, %s281
    %p293 = scmp.eq.s32.totalorder %s25, 1
    %p294 = por %p292, %p293
    %p296 = scmp.ne.s32.totalorder %s281, %s295
    %p297 = scmp.eq.s32.totalorder %s25, 0
    %p298 = por %p296, %p297
    %s300 = sadd.s32 %s299, 1
    %p303 = scmp.eq.s32.totalorder %s19, 1
    %p304 = scmp.ne.s32.totalorder %s299, %s301
    %p305 = scmp.eq.s32.totalorder %s19, 0
    %p306 = por %p304, %p305
    %p307 = scmp.ne.s32.totalorder %s299, %s301
    %p308 = scmp.eq.s32.totalorder %s24, 1
    %p309 = por %p307, %p308
    %p310 = scmp.ne.s32.totalorder %s301, %s302
    %p311 = scmp.eq.s32.totalorder %s24, 0
    %p312 = por %p310, %p311
    %p313 = scmp.ne.s32.totalorder %s301, %s302
    %p314 = scmp.eq.s32.totalorder %s25, 1
    %p315 = por %p313, %p314
    %p317 = scmp.ne.s32.totalorder %s302, %s316
    %p318 = scmp.eq.s32.totalorder %s25, 0
    %p319 = por %p317, %p318
    %s321 = sadd.s32 %s320, 1
    %p324 = scmp.eq.s32.totalorder %s19, 1
    %p325 = scmp.ne.s32.totalorder %s320, %s322
    %p326 = scmp.eq.s32.totalorder %s19, 0
    %p327 = por %p325, %p326
    %p328 = scmp.ne.s32.totalorder %s320, %s322
    %p329 = scmp.eq.s32.totalorder %s24, 1
    %p330 = por %p328, %p329
    %p331 = scmp.ne.s32.totalorder %s322, %s323
    %p332 = scmp.eq.s32.totalorder %s24, 0
    %p333 = por %p331, %p332
    %p334 = scmp.ne.s32.totalorder %s322, %s323
    %p335 = scmp.eq.s32.totalorder %s25, 1
    %p336 = por %p334, %p335
    %p338 = scmp.ne.s32.totalorder %s323, %s337
    %p339 = scmp.eq.s32.totalorder %s25, 0
    %p340 = por %p338, %p339
    %s341 = ssub.s32 %s26, %s38
    %s342 = ssub.s32 %s27, %s34
    %s343 = sor.u32 %s341, %s342
    %p344 = scmp.eq.s32.totalorder %s343, 0
    %s346 = sadd.s32 %s345, 1
    %s347 = scalar_select %p344, %s345, %s346
    %p350 = pneg %p344
    %p351 = scmp.eq.s32.totalorder %s19, 1
    %p352 = por %p350, %p351
    %p353 = scmp.ne.s32.totalorder %s345, %s348
    %p354 = scmp.eq.s32.totalorder %s19, 0
    %p355 = por %p353, %p354
    %p356 = scmp.ne.s32.totalorder %s345, %s348
    %p357 = scmp.eq.s32.totalorder %s24, 1
    %p358 = por %p356, %p357
    %p359 = scmp.ne.s32.totalorder %s348, %s349
    %p360 = scmp.eq.s32.totalorder %s24, 0
    %p361 = por %p359, %p360
    %p362 = scmp.ne.s32.totalorder %s348, %s349
    %p363 = scmp.eq.s32.totalorder %s25, 1
    %p364 = por %p362, %p363
    %p366 = scmp.ne.s32.totalorder %s349, %s365
    %p367 = scmp.eq.s32.totalorder %s25, 0
    %p368 = por %p366, %p367
    %p369 = scmp.le.s32.totalorder 1, %s19
    %p370 = scmp.lt.s32.totalorder %s19, 3
    %p371 = pnand %p369, %p370
    %p372 = pneg %p371
    // Predicated region
    $region9: #{bert_lss_forward.5} parent=5 // pred_check
      _
    $region10: #{bert_lss_forward.5} parent=5 // pred_check_branch
      %374 = sbr.rel (%p371) target = $region12
    $region11: #{bert_lss_forward.5} parent=5 // pred_region
      %s375 = ssub.s32 %s19, 1
      // Predicated region
      $region13: #{bert_lss_forward.5} parent=11 // pred_check
        %p376 = pneg %p186
      $region14: #{bert_lss_forward.5} parent=11 // pred_check_branch
        %378 = sbr.rel (%p376) target = $region16
      $region15: #{bert_lss_forward.5} parent=11 // pred_region
        _
      $region16: #{bert_lss_forward.5} parent=11 // pred_fallthru
        _
      // Predicated region
      $region17: #{bert_lss_forward.5} parent=11 // pred_check
        %p379 = pneg %p207
      $region18: #{bert_lss_forward.5} parent=11 // pred_check_branch
        %381 = sbr.rel (%p379) target = $region20
      $region19: #{bert_lss_forward.5} parent=11 // pred_region
        _
      $region20: #{bert_lss_forward.5} parent=11 // pred_fallthru
        _
      // Predicated region
      $region21: #{bert_lss_forward.5} parent=11 // pred_check
        %p382 = pneg %p228
      $region22: #{bert_lss_forward.5} parent=11 // pred_check_branch
        %384 = sbr.rel (%p382) target = $region24
      $region23: #{bert_lss_forward.5} parent=11 // pred_region
        _
      $region24: #{bert_lss_forward.5} parent=11 // pred_fallthru
        _
      // Predicated region
      $region25: #{bert_lss_forward.5} parent=11 // pred_check
        %p385 = pneg %p249
      $region26: #{bert_lss_forward.5} parent=11 // pred_check_branch
        %387 = sbr.rel (%p385) target = $region28
      $region27: #{bert_lss_forward.5} parent=11 // pred_region
        _
      $region28: #{bert_lss_forward.5} parent=11 // pred_fallthru
        _
      // Predicated region
      $region29: #{bert_lss_forward.5} parent=11 // pred_check
        %p388 = pneg %p270
      $region30: #{bert_lss_forward.5} parent=11 // pred_check_branch
        %390 = sbr.rel (%p388) target = $region32
      $region31: #{bert_lss_forward.5} parent=11 // pred_region
        _
      $region32: #{bert_lss_forward.5} parent=11 // pred_fallthru
        _
      // Predicated region
      $region33: #{bert_lss_forward.5} parent=11 // pred_check
        %p391 = pneg %p291
      $region34: #{bert_lss_forward.5} parent=11 // pred_check_branch
        %393 = sbr.rel (%p391) target = $region36
      $region35: #{bert_lss_forward.5} parent=11 // pred_region
        _
      $region36: #{bert_lss_forward.5} parent=11 // pred_fallthru
        _
      // Predicated region
      $region37: #{bert_lss_forward.5} parent=11 // pred_check
        %p394 = pneg %p312
      $region38: #{bert_lss_forward.5} parent=11 // pred_check_branch
        %396 = sbr.rel (%p394) target = $region40
      $region39: #{bert_lss_forward.5} parent=11 // pred_region
        _
      $region40: #{bert_lss_forward.5} parent=11 // pred_fallthru
        _
      // Predicated region
      $region41: #{bert_lss_forward.5} parent=11 // pred_check
        %p397 = pneg %p333
      $region42: #{bert_lss_forward.5} parent=11 // pred_check_branch
        %399 = sbr.rel (%p397) target = $region44
      $region43: #{bert_lss_forward.5} parent=11 // pred_region
        _
      $region44: #{bert_lss_forward.5} parent=11 // pred_fallthru
        _
    $region12: #{bert_lss_forward.5} parent=5 // pred_fallthru
      _
    %p400 = scmp.lt.s32.totalorder %s19, 2
    // Predicated region
    $region45: #{bert_lss_forward.5} parent=5 // pred_check
      %p401 = pneg %p400
    $region46: #{bert_lss_forward.5} parent=5 // pred_check_branch
      %403 = sbr.rel (%p401) target = $region48
    $region47: #{bert_lss_forward.5} parent=5 // pred_region
      // Predicated region
      $region49: #{bert_lss_forward.5} parent=47 // pred_check
        %p404 = pneg %p53
      $region50: #{bert_lss_forward.5} parent=47 // pred_check_branch
        %406 = sbr.rel (%p404) target = $region52
      $region51: #{bert_lss_forward.5} parent=47 // pred_region
        %p407 = scmp.lt.s32.totalorder %s26, 1
        %s408 = scalar_select %p407, %s26, 1
        %p409 = scmp.lt.s32.totalorder %s27, 0
        %s410 = scalar_select %p409, %s27, 0
        %s411 = sadd.s32 %s410, %s408
        %s412 = smul.addr %s411, 4
        %s413 = scalar_lea.vmem %s0, %s412
      $region52: #{bert_lss_forward.5} parent=47 // pred_fallthru
        _
      // Predicated region
      $region53: #{bert_lss_forward.5} parent=47 // pred_check
        %p414 = pneg %p81
      $region54: #{bert_lss_forward.5} parent=47 // pred_check_branch
        %416 = sbr.rel (%p414) target = $region56
      $region55: #{bert_lss_forward.5} parent=47 // pred_region
        %p417 = scmp.lt.s32.totalorder %s26, 1
        %s418 = scalar_select %p417, %s26, 1
        %p419 = scmp.lt.s32.totalorder %s27, 0
        %s420 = scalar_select %p419, %s27, 0
        %s421 = sadd.s32 %s420, %s418
        %s422 = smul.addr %s421, 4
        %s423 = scalar_lea.vmem %s1, %s422
      $region56: #{bert_lss_forward.5} parent=47 // pred_fallthru
        _
      // Predicated region
      $region57: #{bert_lss_forward.5} parent=47 // pred_check
        %p424 = pneg %p107
      $region58: #{bert_lss_forward.5} parent=47 // pred_check_branch
        %426 = sbr.rel (%p424) target = $region60
      $region59: #{bert_lss_forward.5} parent=47 // pred_region
        %p427 = scmp.lt.s32.totalorder %s26, 1
        %s428 = scalar_select %p427, %s26, 1
        %s429 = smul.addr %s428, 4
        %s430 = smul.addr %s429, 4
        %s431 = scalar_lea.vmem %s2, %s430
      $region60: #{bert_lss_forward.5} parent=47 // pred_fallthru
        _
      // Predicated region
      $region61: #{bert_lss_forward.5} parent=47 // pred_check
        %p432 = pneg %p133
      $region62: #{bert_lss_forward.5} parent=47 // pred_check_branch
        %434 = sbr.rel (%p432) target = $region64
      $region63: #{bert_lss_forward.5} parent=47 // pred_region
        %p435 = scmp.lt.s32.totalorder %s26, 1
        %s436 = scalar_select %p435, %s26, 1
        %s437 = smul.addr %s436, 4
        %s438 = scalar_lea.vmem %s3, %s437
      $region64: #{bert_lss_forward.5} parent=47 // pred_fallthru
        _
      // Predicated region
      $region65: #{bert_lss_forward.5} parent=47 // pred_check
        %p439 = pneg %p159
      $region66: #{bert_lss_forward.5} parent=47 // pred_check_branch
        %441 = sbr.rel (%p439) target = $region68
      $region67: #{bert_lss_forward.5} parent=47 // pred_region
        %p442 = scmp.lt.s32.totalorder %s26, 1
        %s443 = scalar_select %p442, %s26, 1
        %s444 = scalar_lea.vmem %s4, %s443
      $region68: #{bert_lss_forward.5} parent=47 // pred_fallthru
        _
    $region48: #{bert_lss_forward.5} parent=5 // pred_fallthru
      _
    %p445 = scmp.le.s32.totalorder 1, %s19
    %p446 = scmp.lt.s32.totalorder %s19, 3
    %p447 = pnand %p445, %p446
    %p448 = pneg %p447
    // Predicated region
    $region69: #{bert_lss_forward.5} parent=5 // pred_check
      _
    $region70: #{bert_lss_forward.5} parent=5 // pred_check_branch
      %450 = sbr.rel (%p447) target = $region72
    $region71: #{bert_lss_forward.5} parent=5 // pred_region
      %s451 = ssub.s32 %s19, 1
      %p452 = scmp.lt.s32.totalorder %s28, 1
      %s453 = scalar_select %p452, %s28, 1
      %p454 = scmp.lt.s32.totalorder %s29, 0
      %s455 = scalar_select %p454, %s29, 0
      %s456 = sadd.s32 %s455, %s453
      %s457 = smul.addr %s456, 4
      %s458 = scalar_lea.vmem %s0, %s457
      %p459 = pneg %p59
      %p460 = pneg %p56
      %p461 = scmp.lt.s32.totalorder %s28, 1
      %s462 = scalar_select %p461, %s28, 1
      %p463 = scmp.lt.s32.totalorder %s29, 0
      %s464 = scalar_select %p463, %s29, 0
      %s465 = sadd.s32 %s464, %s462
      %s466 = smul.addr %s465, 4
      %s467 = scalar_lea.vmem %s1, %s466
      %p468 = pneg %p87
      %p469 = pneg %p84
      %p470 = scmp.lt.s32.totalorder %s28, 1
      %s471 = scalar_select %p470, %s28, 1
      %s472 = smul.addr %s471, 4
      %s473 = smul.addr %s472, 4
      %s474 = scalar_lea.vmem %s2, %s473
      %p475 = pneg %p113
      %p476 = pneg %p110
      %p477 = scmp.lt.s32.totalorder %s28, 1
      %s478 = scalar_select %p477, %s28, 1
      %s479 = smul.addr %s478, 4
      %s480 = scalar_lea.vmem %s3, %s479
      %p481 = pneg %p139
      %p482 = pneg %p136
      %p483 = scmp.lt.s32.totalorder %s28, 1
      %s484 = scalar_select %p483, %s28, 1
      %s485 = scalar_lea.vmem %s4, %s484
      %p486 = pneg %p165
      %p487 = pneg %p162
      %p488 = pneg %p186
      %p489 = pneg %p183
      %p490 = pneg %p207
      %p491 = pneg %p204
      %p492 = pneg %p228
      %p493 = pneg %p225
      %p494 = pneg %p249
      %p495 = pneg %p246
      %p496 = pneg %p270
      %p497 = pneg %p267
      %p498 = pneg %p291
      %p499 = pneg %p288
      %p500 = pneg %p312
      %p501 = pneg %p309
      %p502 = pneg %p333
      %p503 = pneg %p330
      %p504 = pneg %p361
      %p505 = pneg %p358
      %p506 = scmp.lt.s32.totalorder %s28, 1
      %s507 = scalar_select %p506, %s28, 1
      %p508 = scmp.lt.s32.totalorder %s29, 0
      %s509 = scalar_select %p508, %s29, 0
      %s510 = sadd.s32 %s509, %s507
      %s511 = smul.addr %s510, 4
      %s512 = scalar_lea.vmem %s13, %s511
      %p513 = scmp.lt.s32.totalorder %s28, 1
      %s514 = scalar_select %p513, %s28, 1
      %p515 = scmp.lt.s32.totalorder %s29, 0
      %s516 = scalar_select %p515, %s29, 0
      %s517 = sadd.s32 %s516, %s514
      %s518 = smul.addr %s517, 4
      %s519 = scalar_lea.vmem %s0, %s518
      %p520 = scmp.lt.s32.totalorder %s28, 1
      %s521 = scalar_select %p520, %s28, 1
      %p522 = scmp.lt.s32.totalorder %s29, 0
      %s523 = scalar_select %p522, %s29, 0
      %s524 = sadd.s32 %s523, %s521
      %s525 = smul.addr %s524, 4
      %s526 = scalar_lea.vmem %s1, %s525
      %p527 = scmp.lt.s32.totalorder %s28, 1
      %s528 = scalar_select %p527, %s28, 1
      %s529 = smul.addr %s528, 4
      %s530 = smul.addr %s529, 4
      %s531 = scalar_lea.vmem %s2, %s530
      %p532 = scmp.lt.s32.totalorder %s28, 1
      %s533 = scalar_select %p532, %s28, 1
      %s534 = smul.addr %s533, 4
      %s535 = scalar_lea.vmem %s3, %s534
      %p536 = scmp.lt.s32.totalorder %s28, 1
      %s537 = scalar_select %p536, %s28, 1
      %s538 = scalar_lea.vmem %s4, %s537
      %p539 = scmp.lt.s32.totalorder %s28, 1
      %s540 = scalar_select %p539, %s28, 1
      %p541 = scmp.lt.s32.totalorder %s29, 0
      %s542 = scalar_select %p541, %s29, 0
      %s543 = sadd.s32 %s542, %s540
      %s544 = smul.addr %s543, 4
      %s545 = scalar_lea.vmem %s13, %s544
      %v547 = vld [vmem:[%s519] sm:$0xf]
      %v548 = vunpack.c.l.bf16 %v547
      %v549 = vld [vmem:[%s526] sm:$0xf]
      %v550 = vld [vmem:[%s531] sm:$0xf]
      %v551 = vld [vmem:[%s531 + $0x4] sm:$0xf]
      %v552 = vld [vmem:[%s531 + $0x8] sm:$0xf]
      %v553 = vld [vmem:[%s531 + $0xc] sm:$0xf]
      %v554 = vld [vmem:[%s535] sm:$0xf]
      %v555 = vld [vmem:[%s538] sm:$0x1]
      %v557 = vperm.slane %v555, 0
      %vm559 = vcmask 64512
      %v561 = vsel %vm559, %v549, 0
      %vm563 = vcmask 1043456
      %v565 = vsel %vm563, %v550, 0
      %567 = vmatpush.bf16.msra.mxu0 0
      %568 = vmatpush.bf16.msra.mxu0 0
      %569 = vmatpush.bf16.msra.mxu0 0
      %570 = vmatpush.bf16.msra.mxu0 0
      %571 = vmatpush.bf16.msra.mxu0 0
      %572 = vmatpush.bf16.msra.mxu0 0
      %573 = vmatpush.bf16.msra.mxu0 0
      %574 = vmatpush.bf16.msra.mxu0 %v565
      %575 = vmatmul.bf16.gmra.mxu0 %v561
      %v576 = vpop.f32.mrf.mxu0
      %v577 = vadd.f32 %v557, %v576
      %v578 = vpop.f32.mrf.mxu0
      %579 = vdwg.mxu0
      %v580 = vsel %vm559, %v577, -inf
      %581 = vmax.xlane.f32.xlu0 %v580
      %v582 = vpop.xlane.xlu0 %581
      %v583 = vsub.f32 %v577, %v582
      %v584 = vmul.f32 %v583, 1.442695
      %v585 = vpow.pop %v584
      %v586 = vsel %vm559, %v585, 0.0
      %587 = vadd.xlane.f32.xlu0 %v586
      %v588 = vpop.xlane.xlu0 %587
      %v589 = vpack.c.bf16 %v585, %v585
      %v591 = vsel %vm559, %v589, 0
      %v594 = vsel %vm563, %v554, 0
      %596 = vmatpush.bf16.msra.mxu0 0
      %597 = vmatpush.bf16.msra.mxu0 0
      %598 = vmatpush.bf16.msra.mxu0 0
      %599 = vmatpush.bf16.msra.mxu0 0
      %600 = vmatpush.bf16.msra.mxu0 0
      %601 = vmatpush.bf16.msra.mxu0 0
      %602 = vmatpush.bf16.msra.mxu0 0
      %603 = vmatpush.bf16.msra.mxu0 %v594
      %604 = vmatmul.bf16.gmra.mxu0 %v591
      %v605 = vpop.f32.mrf.mxu0
      %v606 = vadd.f32 0.0, %v605
      %v607 = vpop.f32.mrf.mxu0
      %608 = vdwg.mxu0
      %v609 = vrcp.pop %v588
      %v610 = vmul.f32 %v606, %v609
      %v611 = vpack.c.bf16 %v610, %v610
      %v612 = vld [vmem:[%s5] sm:$0xf]
      %v614 = vunpack.c.l.b16 %v549
      %v615 = vpack.c.b16 %v614, %v614
      %616 = vrot.lane.b32.xlu0 %v615, 120
      %v617 = vpop.permute.xlu0 %616
      %v619 = vsel %vm559, %v617, 0
      %v622 = vsel %vm563, %v551, 0
      %624 = vmatpush.bf16.msra.mxu0 0
      %625 = vmatpush.bf16.msra.mxu0 0
      %626 = vmatpush.bf16.msra.mxu0 0
      %627 = vmatpush.bf16.msra.mxu0 0
      %628 = vmatpush.bf16.msra.mxu0 0
      %629 = vmatpush.bf16.msra.mxu0 0
      %630 = vmatpush.bf16.msra.mxu0 0
      %631 = vmatpush.bf16.msra.mxu0 %v622
      %632 = vmatmul.bf16.gmra.mxu0 %v619
      %v633 = vpop.f32.mrf.mxu0
      %v634 = vadd.f32 %v557, %v633
      %v635 = vpop.f32.mrf.mxu0
      %636 = vdwg.mxu0
      %v637 = vsel %vm559, %v634, -inf
      %638 = vmax.xlane.f32.xlu0 %v637
      %v639 = vpop.xlane.xlu0 %638
      %v640 = vsub.f32 %v634, %v639
      %v641 = vmul.f32 %v640, 1.442695
      %v642 = vpow.pop %v641
      %v643 = vsel %vm559, %v642, 0.0
      %644 = vadd.xlane.f32.xlu0 %v643
      %v645 = vpop.xlane.xlu0 %644
      %v646 = vpack.c.bf16 %v642, %v642
      %v648 = vunpack.c.l.b16 %v554
      %v649 = vpack.c.b16 %v648, %v648
      %650 = vrot.lane.b32.xlu0 %v649, 120
      %v651 = vpop.permute.xlu0 %650
      %v653 = vsel %vm559, %v646, 0
      %v656 = vsel %vm563, %v651, 0
      %658 = vmatpush.bf16.msra.mxu0 0
      %659 = vmatpush.bf16.msra.mxu0 0
      %660 = vmatpush.bf16.msra.mxu0 0
      %661 = vmatpush.bf16.msra.mxu0 0
      %662 = vmatpush.bf16.msra.mxu0 0
      %663 = vmatpush.bf16.msra.mxu0 0
      %664 = vmatpush.bf16.msra.mxu0 0
      %665 = vmatpush.bf16.msra.mxu0 %v656
      %666 = vmatmul.bf16.gmra.mxu0 %v653
      %v667 = vpop.f32.mrf.mxu0
      %v668 = vadd.f32 0.0, %v667
      %v669 = vpop.f32.mrf.mxu0
      %670 = vdwg.mxu0
      %v671 = vrcp.pop %v645
      %v672 = vmul.f32 %v668, %v671
      %v673 = vpack.c.bf16 %v672, %v672
      %s674 = scalar_lea.vmem %s5, 4
      %v675 = vld [vmem:[%s674] sm:$0xf]
      %v677 = vsel %vm559, %v673, 0
      %v680 = vsel %vm563, %v675, 0
      %682 = vmatpush.bf16.msra.mxu0 0
      %683 = vmatpush.bf16.msra.mxu0 0
      %684 = vmatpush.bf16.msra.mxu0 0
      %685 = vmatpush.bf16.msra.mxu0 0
      %686 = vmatpush.bf16.msra.mxu0 0
      %687 = vmatpush.bf16.msra.mxu0 0
      %688 = vmatpush.bf16.msra.mxu0 0
      %689 = vmatpush.bf16.msra.mxu0 %v680
      %690 = vmatmul.bf16.gmra.mxu0 %v677
      %v691 = vpop.f32.mrf.mxu0
      %v692 = vadd.f32 0.0, %v691
      %v693 = vpop.f32.mrf.mxu0
      %694 = vdwg.mxu0
      %v696 = vsel %vm559, %v611, 0
      %v699 = vsel %vm563, %v612, 0
      %701 = vmatpush.bf16.msra.mxu0 0
      %702 = vmatpush.bf16.msra.mxu0 0
      %703 = vmatpush.bf16.msra.mxu0 0
      %704 = vmatpush.bf16.msra.mxu0 0
      %705 = vmatpush.bf16.msra.mxu0 0
      %706 = vmatpush.bf16.msra.mxu0 0
      %707 = vmatpush.bf16.msra.mxu0 0
      %708 = vmatpush.bf16.msra.mxu0 %v699
      %709 = vmatmul.bf16.gmra.mxu0 %v696
      %v710 = vpop.f32.mrf.mxu0
      %v711 = vadd.f32 %v692, %v710
      %v712 = vpop.f32.mrf.mxu0
      %713 = vdwg.mxu0
      %714 = vrot.lane.b32.xlu0 %v615, 112
      %v715 = vpop.permute.xlu0 %714
      %v717 = vsel %vm559, %v715, 0
      %v720 = vsel %vm563, %v552, 0
      %722 = vmatpush.bf16.msra.mxu0 0
      %723 = vmatpush.bf16.msra.mxu0 0
      %724 = vmatpush.bf16.msra.mxu0 0
      %725 = vmatpush.bf16.msra.mxu0 0
      %726 = vmatpush.bf16.msra.mxu0 0
      %727 = vmatpush.bf16.msra.mxu0 0
      %728 = vmatpush.bf16.msra.mxu0 0
      %729 = vmatpush.bf16.msra.mxu0 %v720
      %730 = vmatmul.bf16.gmra.mxu0 %v717
      %v731 = vpop.f32.mrf.mxu0
      %v732 = vadd.f32 %v557, %v731
      %v733 = vpop.f32.mrf.mxu0
      %734 = vdwg.mxu0
      %v735 = vsel %vm559, %v732, -inf
      %736 = vmax.xlane.f32.xlu0 %v735
      %v737 = vpop.xlane.xlu0 %736
      %v738 = vsub.f32 %v732, %v737
      %v739 = vmul.f32 %v738, 1.442695
      %v740 = vpow.pop %v739
      %v741 = vsel %vm559, %v740, 0.0
      %742 = vadd.xlane.f32.xlu0 %v741
      %v743 = vpop.xlane.xlu0 %742
      %v744 = vpack.c.bf16 %v740, %v740
      %745 = vrot.lane.b32.xlu0 %v649, 112
      %v746 = vpop.permute.xlu0 %745
      %v748 = vsel %vm559, %v744, 0
      %v751 = vsel %vm563, %v746, 0
      %753 = vmatpush.bf16.msra.mxu0 0
      %754 = vmatpush.bf16.msra.mxu0 0
      %755 = vmatpush.bf16.msra.mxu0 0
      %756 = vmatpush.bf16.msra.mxu0 0
      %757 = vmatpush.bf16.msra.mxu0 0
      %758 = vmatpush.bf16.msra.mxu0 0
      %759 = vmatpush.bf16.msra.mxu0 0
      %760 = vmatpush.bf16.msra.mxu0 %v751
      %761 = vmatmul.bf16.gmra.mxu0 %v748
      %v762 = vpop.f32.mrf.mxu0
      %v763 = vadd.f32 0.0, %v762
      %v764 = vpop.f32.mrf.mxu0
      %765 = vdwg.mxu0
      %v766 = vrcp.pop %v743
      %v767 = vmul.f32 %v763, %v766
      %v768 = vpack.c.bf16 %v767, %v767
      %s769 = scalar_lea.vmem %s5, 8
      %v770 = vld [vmem:[%s769] sm:$0xf]
      %v772 = vsel %vm559, %v768, 0
      %v775 = vsel %vm563, %v770, 0
      %777 = vmatpush.bf16.msra.mxu0 0
      %778 = vmatpush.bf16.msra.mxu0 0
      %779 = vmatpush.bf16.msra.mxu0 0
      %780 = vmatpush.bf16.msra.mxu0 0
      %781 = vmatpush.bf16.msra.mxu0 0
      %782 = vmatpush.bf16.msra.mxu0 0
      %783 = vmatpush.bf16.msra.mxu0 0
      %784 = vmatpush.bf16.msra.mxu0 %v775
      %785 = vmatmul.bf16.gmra.mxu0 %v772
      %v786 = vpop.f32.mrf.mxu0
      %v787 = vadd.f32 0.0, %v786
      %v788 = vpop.f32.mrf.mxu0
      %789 = vdwg.mxu0
      %v790 = vadd.f32 %v711, %v787
      %791 = vrot.lane.b32.xlu0 %v615, 104
      %v792 = vpop.permute.xlu0 %791
      %v794 = vsel %vm559, %v792, 0
      %v797 = vsel %vm563, %v553, 0
      %799 = vmatpush.bf16.msra.mxu0 0
      %800 = vmatpush.bf16.msra.mxu0 0
      %801 = vmatpush.bf16.msra.mxu0 0
      %802 = vmatpush.bf16.msra.mxu0 0
      %803 = vmatpush.bf16.msra.mxu0 0
      %804 = vmatpush.bf16.msra.mxu0 0
      %805 = vmatpush.bf16.msra.mxu0 0
      %806 = vmatpush.bf16.msra.mxu0 %v797
      %807 = vmatmul.bf16.gmra.mxu0 %v794
      %v808 = vpop.f32.mrf.mxu0
      %v809 = vadd.f32 %v557, %v808
      %v810 = vpop.f32.mrf.mxu0
      %811 = vdwg.mxu0
      %v812 = vsel %vm559, %v809, -inf
      %813 = vmax.xlane.f32.xlu0 %v812
      %v814 = vpop.xlane.xlu0 %813
      %v815 = vsub.f32 %v809, %v814
      %v816 = vmul.f32 %v815, 1.442695
      %v817 = vpow.pop %v816
      %v818 = vsel %vm559, %v817, 0.0
      %819 = vadd.xlane.f32.xlu0 %v818
      %v820 = vpop.xlane.xlu0 %819
      %v821 = vpack.c.bf16 %v817, %v817
      %822 = vrot.lane.b32.xlu0 %v649, 104
      %v823 = vpop.permute.xlu0 %822
      %v825 = vsel %vm559, %v821, 0
      %v828 = vsel %vm563, %v823, 0
      %830 = vmatpush.bf16.msra.mxu0 0
      %831 = vmatpush.bf16.msra.mxu0 0
      %832 = vmatpush.bf16.msra.mxu0 0
      %833 = vmatpush.bf16.msra.mxu0 0
      %834 = vmatpush.bf16.msra.mxu0 0
      %835 = vmatpush.bf16.msra.mxu0 0
      %836 = vmatpush.bf16.msra.mxu0 0
      %837 = vmatpush.bf16.msra.mxu0 %v828
      %838 = vmatmul.bf16.gmra.mxu0 %v825
      %v839 = vpop.f32.mrf.mxu0
      %v840 = vadd.f32 0.0, %v839
      %v841 = vpop.f32.mrf.mxu0
      %842 = vdwg.mxu0
      %v843 = vrcp.pop %v820
      %v844 = vmul.f32 %v840, %v843
      %v845 = vpack.c.bf16 %v844, %v844
      %s846 = scalar_lea.vmem %s5, 12
      %v847 = vld [vmem:[%s846] sm:$0xf]
      %v849 = vsel %vm559, %v845, 0
      %v852 = vsel %vm563, %v847, 0
      %854 = vmatpush.bf16.msra.mxu0 0
      %855 = vmatpush.bf16.msra.mxu0 0
      %856 = vmatpush.bf16.msra.mxu0 0
      %857 = vmatpush.bf16.msra.mxu0 0
      %858 = vmatpush.bf16.msra.mxu0 0
      %859 = vmatpush.bf16.msra.mxu0 0
      %860 = vmatpush.bf16.msra.mxu0 0
      %861 = vmatpush.bf16.msra.mxu0 %v852
      %862 = vmatmul.bf16.gmra.mxu0 %v849
      %v863 = vpop.f32.mrf.mxu0
      %v864 = vadd.f32 0.0, %v863
      %v865 = vpop.f32.mrf.mxu0
      %866 = vdwg.mxu0
      %v867 = vadd.f32 %v790, %v864
      %v868 = vadd.f32 %v548, %v867
      %v869 = vld [vmem:[%s6] sm:$0x1]
      %v871 = vperm.slane %v869, 0
      %v873 = vadd.f32 %v868, %v871
      %v874 = vld [vmem:[%s7] sm:$0x1]
      %v875 = vld [vmem:[%s8] sm:$0x1]
      %vm876 = vcmask 261120
      %v877 = vsel %vm876, %v873, 0.0
      %878 = vadd.xlane.f32.xlu0 %v877
      %v879 = vpop.xlane.xlu0 %878
      %v880 = vrcp.pop 32.0
      %v881 = vmul.f32 32.0, %v880
      %v882 = vsub.f32 1.0, %v881
      %v883 = vmul.f32 %v880, %v882
      %v884 = vadd.f32 %v880, %v883
      %vm885 = vweird.f32 %v880
      %v886 = vsel %vm885, %v880, %v884
      %v887 = vmul.f32 %v879, %v886
      %v888 = vsub.f32 %v873, %v887
      %v889 = vmul.f32 %v888, %v888
      %v890 = vsel %vm876, %v889, 0.0
      %891 = vadd.xlane.f32.xlu0 %v890
      %v892 = vpop.xlane.xlu0 %891
      %v893 = vmul.f32 %v892, 0.032258064
      %v894 = vrsqrt.pop %v893
      %v895 = vmul.f32 %v894, %v893
      %v896 = vmul.f32 %v895, %v894
      %v897 = vmul.f32 0.5, %v896
      %v898 = vsub.f32 1.5, %v897
      %v899 = vmul.f32 %v894, %v898
      %v900 = vmul.f32 %v893, %v899
      %vm901 = vcmp.eq.f32.partialorder %v893, inf
      %v902 = vsel %vm901, %v893, %v900
      %vm903 = vcmp.eq.f32.partialorder %v893, 0.0
      %v904 = vand.u32 %v893, 2147483648
      %v905 = vsel %vm903, %v904, %v902
      %v906 = vadd.f32 %v905, 1e-06
      %v907 = vrcp.pop %v906
      %v908 = vmul.f32 %v888, %v907
      %v910 = vperm.slane %v874, 0
      %v912 = vmul.f32 %v908, %v910
      %v914 = vperm.slane %v875, 0
      %v916 = vadd.f32 %v912, %v914
      %v917 = vpack.c.bf16 %v916, %v916
      %v918 = vld [vmem:[%s9] sm:$0xf]
      %v919 = vld [vmem:[%s9 + $0x4] sm:$0xf]
      %v920 = vld [vmem:[%s9 + $0x8] sm:$0xf]
      %v921 = vld [vmem:[%s9 + $0xc] sm:$0xf]
      %v922 = vld [vmem:[%s10] sm:$0x1]
      %v924 = vperm.slane %v922, 0
      %v930 = vunpack.c.l.b16 %v918
      %v931 = vunpack.c.l.b16 %v919
      %v932 = vunpack.c.l.b16 %v920
      %v933 = vunpack.c.l.b16 %v921
      %v934 = vpack.c.b16 %v931, %v930
      %v935 = vpack.c.b16 %v933, %v932
      %v939 = vsel %vm876, %v917, 0
      %941 = vmatpush.bf16.msra.mxu0 0
      %942 = vmatpush.bf16.msra.mxu0 0
      %943 = vmatpush.bf16.msra.mxu0 0
      %944 = vmatpush.bf16.msra.mxu0 0
      %945 = vmatpush.bf16.msra.mxu0 0
      %946 = vmatpush.bf16.msra.mxu0 0
      %947 = vmatpush.bf16.msra.mxu0 %v935
      %948 = vmatpush.bf16.msra.mxu0 %v934
      %949 = vmatmul.bf16.gmra.mxu0 %v939
      %v950 = vpop.f32.mrf.mxu0
      %v951 = vadd.f32 %v924, %v950
      %v952 = vpop.f32.mrf.mxu0
      %953 = vdwg.mxu0
      %v954 = vmul.f32 %v951, 0.5
      %v955 = vmul.f32 %v951, 0.044715
      %v956 = vmul.f32 %v955, %v951
      %v957 = vmul.f32 %v956, %v951
      %v958 = vadd.f32 %v951, %v957
      %v959 = vmul.f32 %v958, 0.7978846
      %v960 = vtanh.pop %v959
      %v961 = vadd.f32 %v960, 1.0
      %v962 = vmul.f32 %v954, %v961
      %v963 = vpack.c.bf16 %v962, %v962
      %v964 = vld [vmem:[%s11] sm:$0xf]
      %v965 = vld [vmem:[%s11 + $0x4] sm:$0xf]
      %v966 = vld [vmem:[%s11 + $0x8] sm:$0xf]
      %v967 = vld [vmem:[%s11 + $0xc] sm:$0xf]
      %v968 = vld [vmem:[%s11 + $0x10] sm:$0xf]
      %v969 = vld [vmem:[%s11 + $0x14] sm:$0xf]
      %v970 = vld [vmem:[%s11 + $0x18] sm:$0xf]
      %v971 = vld [vmem:[%s11 + $0x1c] sm:$0xf]
      %v972 = vld [vmem:[%s11 + $0x20] sm:$0xf]
      %v973 = vld [vmem:[%s11 + $0x24] sm:$0xf]
      %v974 = vld [vmem:[%s11 + $0x28] sm:$0xf]
      %v975 = vld [vmem:[%s11 + $0x2c] sm:$0xf]
      %v976 = vld [vmem:[%s11 + $0x30] sm:$0xf]
      %v977 = vld [vmem:[%s11 + $0x34] sm:$0xf]
      %v978 = vld [vmem:[%s11 + $0x38] sm:$0xf]
      %v979 = vld [vmem:[%s11 + $0x3c] sm:$0xf]
      %v980 = vld [vmem:[%s12] sm:$0x1]
      %v982 = vperm.slane %v980, 0
      %v1000 = vunpack.c.l.b16 %v964
      %v1001 = vunpack.c.l.b16 %v965
      %v1002 = vunpack.c.l.b16 %v966
      %v1003 = vunpack.c.l.b16 %v967
      %v1004 = vunpack.c.l.b16 %v968
      %v1005 = vunpack.c.l.b16 %v969
      %v1006 = vunpack.c.l.b16 %v970
      %v1007 = vunpack.c.l.b16 %v971
      %v1008 = vunpack.c.l.b16 %v972
      %v1009 = vunpack.c.l.b16 %v973
      %v1010 = vunpack.c.l.b16 %v974
      %v1011 = vunpack.c.l.b16 %v975
      %v1012 = vunpack.c.l.b16 %v976
      %v1013 = vunpack.c.l.b16 %v977
      %v1014 = vunpack.c.l.b16 %v978
      %v1015 = vunpack.c.l.b16 %v979
      %v1016 = vpack.c.b16 %v1001, %v1000
      %v1017 = vpack.c.b16 %v1003, %v1002
      %v1018 = vpack.c.b16 %v1005, %v1004
      %v1019 = vpack.c.b16 %v1007, %v1006
      %v1020 = vpack.c.b16 %v1009, %v1008
      %v1021 = vpack.c.b16 %v1011, %v1010
      %v1022 = vpack.c.b16 %v1013, %v1012
      %v1023 = vpack.c.b16 %v1015, %v1014
      %1032 = vmatpush.bf16.msra.mxu0 %v1023
      %1033 = vmatpush.bf16.msra.mxu0 %v1022
      %1034 = vmatpush.bf16.msra.mxu0 %v1021
      %1035 = vmatpush.bf16.msra.mxu0 %v1020
      %1036 = vmatpush.bf16.msra.mxu0 %v1019
      %1037 = vmatpush.bf16.msra.mxu0 %v1018
      %1038 = vmatpush.bf16.msra.mxu0 %v1017
      %1039 = vmatpush.bf16.msra.mxu0 %v1016
      %1040 = vmatmul.bf16.gmra.mxu0 %v963
      %v1041 = vpop.f32.mrf.mxu0
      %v1042 = vadd.f32 %v982, %v1041
      %v1043 = vpop.f32.mrf.mxu0
      %1044 = vdwg.mxu0
      %v1045 = vadd.f32 %v873, %v1042
      %v1046 = vpack.c.bf16 %v1045, %v1045
      %vm1047 = vcmask 257024
      %1048 = vst.msk [vmem:[%s545] sm:$0xf] %vm1047, %v1046
      %p1049 = scmp.lt.s32.totalorder %s28, 1
      %s1050 = scalar_select %p1049, %s28, 1
      %p1051 = scmp.lt.s32.totalorder %s29, 0
      %s1052 = scalar_select %p1051, %s29, 0
      %s1053 = sadd.s32 %s1052, %s1050
      %s1054 = smul.addr %s1053, 4
      %s1055 = scalar_lea.vmem %s13, %s1054
      // Predicated region
      $region73: #{bert_lss_forward.5} parent=71 // pred_check
        %p1056 = pneg %p358
      $region74: #{bert_lss_forward.5} parent=71 // pred_check_branch
        %1058 = sbr.rel (%p1056) target = $region76
      $region75: #{bert_lss_forward.5} parent=71 // pred_region
        _
      $region76: #{bert_lss_forward.5} parent=71 // pred_fallthru
        _
    $region72: #{bert_lss_forward.5} parent=5 // pred_fallthru
      _
    %p1059 = scmp.le.s32.totalorder 2, %s19
    // Predicated region
    $region77: #{bert_lss_forward.5} parent=5 // pred_check
      %p1060 = pneg %p1059
    $region78: #{bert_lss_forward.5} parent=5 // pred_check_branch
      %1062 = sbr.rel (%p1060) target = $region80
    $region79: #{bert_lss_forward.5} parent=5 // pred_region
      %s1063 = ssub.s32 %s19, 2
      // Predicated region
      $region81: #{bert_lss_forward.5} parent=79 // pred_check
        %p1064 = pneg %p364
      $region82: #{bert_lss_forward.5} parent=79 // pred_check_branch
        %1066 = sbr.rel (%p1064) target = $region84
      $region83: #{bert_lss_forward.5} parent=79 // pred_region
        %p1067 = scmp.lt.s32.totalorder %s30, 1
        %s1068 = scalar_select %p1067, %s30, 1
        %p1069 = scmp.lt.s32.totalorder %s31, 0
        %s1070 = scalar_select %p1069, %s31, 0
        %s1071 = sadd.s32 %s1070, %s1068
        %s1072 = smul.addr %s1071, 4
        %s1073 = scalar_lea.vmem %s13, %s1072
      $region84: #{bert_lss_forward.5} parent=79 // pred_fallthru
        _
    $region80: #{bert_lss_forward.5} parent=5 // pred_fallthru
      _
  $region6: #{bert_lss_forward.5} parent=0 // loop_footer
    %s23 = sadd.s32 1, %s19
  $region7: #{bert_lss_forward.5} parent=0 // loop_footer_branch
    %18 = sbr.rel target = $region3
  $region8: #{bert_lss_forward.5} parent=0 // loop_exit
    _

</llo_original>
